<compile_context>
chip_gen: v7x
topology: tpu7x:2x2x1
jax: 0.10.0
libtpu: 0.0.40
codegen_flags: <defaults>
</compile_context>

<pallas_src>
import functools

import jax
import jax.numpy as jnp
from jax.experimental import pallas as pl
from jax.experimental.pallas import tpu as pltpu


def _ceil_to(a, b):
    return -(-a // b) * b


# ----------------------------------------------------------------------------
# Pallas kernels
# ----------------------------------------------------------------------------
def _conv_stats_kernel(a_ref, w_ref, y_ref, stats_ref, acc_ref):
    """Per-phase im2col GEMM tile + BatchNorm statistics.

    a_ref:     (tile_m, tk)    bf16 patches tile
    w_ref:     (tk, Coutp)     bf16 per-phase weight slab
    y_ref:     (tile_m, Coutp) bf16 conv output tile
    stats_ref: (8, Coutp)      f32; row 0 = sum, row 1 = sum of squares
                               (rows 2..7 sublane padding).  One slab per
                               phase so the phase grid axis stays parallel.
    acc_ref:   (tile_m, Coutp) f32 accumulator scratch (K tiling).
    """
    mi = pl.program_id(1)
    ki = pl.program_id(2)
    k_last = pl.num_programs(2) - 1

    @pl.when(ki == 0)
    def _():
        acc_ref[...] = jnp.zeros_like(acc_ref)

    acc_ref[...] += jnp.dot(a_ref[...], w_ref[...],
                            preferred_element_type=jnp.float32)

    @pl.when((mi == 0) & (ki == 0))
    def _():
        stats_ref[...] = jnp.zeros_like(stats_ref)

    @pl.when(ki == k_last)
    def _():
        y = acc_ref[...]
        y_ref[...] = y.astype(y_ref.dtype)
        # Padded rows / padded lanes are exactly zero, so they add 0 to both
        # sums; the wrapper divides by the TRUE element count M (never by the
        # padded row count).
        stats_ref[0:1, :] += jnp.sum(y, axis=0, keepdims=True)
        stats_ref[1:2, :] += jnp.sum(y * y, axis=0, keepdims=True)


def _norm_act_kernel(y_ref, scale_ref, shift_ref, o_ref, *, apply_act, slope):
    """Per-channel affine (folded BatchNorm) + optional (Leaky)ReLU."""
    z = y_ref[...].astype(jnp.float32) * scale_ref[...] + shift_ref[...]
    if apply_act:
        z = jnp.where(z >= 0, z, slope * z)
    o_ref[...] = z.astype(o_ref.dtype)


# ----------------------------------------------------------------------------
# Wrapper
# ----------------------------------------------------------------------------
def decbr2d_forward(x, weight, gamma, beta, *, kernel_size=4, stride=1,
                    padding=1, output_padding=0, norm=True, relu=(),
                    eps=1e-5, tile_m=512, max_tile_k=2048):
    """Forward pass of DECBR2D.

    x:      (N, Cin, H, W)    float32, NCHW (PyTorch convention)
    weight: (Cin, Cout, k, k) ConvTranspose2d weight (PyTorch layout, bias=False)
    gamma, beta: (Cout,)      BatchNorm2d affine parameters
    relu:   []/() -> no activation, 0 -> ReLU, a > 0 -> LeakyReLU(a)
    """
    N, Cin, H, W = x.shape
    k, s, p, op = kernel_size, stride, padding, output_padding
    Cout = weight.shape[1]

    Ho = (H - 1) * s - 2 * p + k + op
    Wo = (W - 1) * s - 2 * p + k + op
    M_total = N * Ho * Wo                     # true element count for BN stats

    kk = -(-k // s)                           # taps per axis per phase
    P = s * s                                 # sub-pixel phases
    Hq = -(-Ho // s)                          # per-phase output height (max)
    Wq = -(-Wo // s)
    K = Cin * kk * kk

    # ---- sub-pixel phase decomposition (no zero insertion) -----------------
    # out[yo=oy*s+qy, xo=ox*s+qx] =
    #   sum_{jh,jw,ci} x[oy + d(qy) - jh, ox + d(qx) - jw, ci]
    #                  * W[ci, :, r(qy)+jh*s, r(qx)+jw*s]
    # with r(q) = (q+p) % s, d(q) = (q+p) // s, out-of-range taps = 0.
    x_nhwc = jnp.transpose(x.astype(jnp.float32), (0, 2, 3, 1))   # (N,H,W,Cin)
    Lh = max(0, kk - 1 - p // s)
    Lw = Lh
    Rh = max(0, (s - 1 + p) // s + Hq - H)
    Rw = max(0, (s - 1 + p) // s + Wq - W)
    xp = jnp.pad(x_nhwc, ((0, 0), (Lh, Rh), (Lw, Rw), (0, 0)))

    # Per-phase weight slabs; spatial zero-pad so every phase has kk*kk taps.
    w_sp = jnp.pad(weight.astype(jnp.float32),
                   ((0, 0), (0, 0), (0, kk * s - k), (0, kk * s - k)))

    patch_list, w_list = [], []
    for qy in range(s):
        rh, dh = (qy + p) % s, (qy + p) // s
        for qx in range(s):
            rw, dw = (qx + p) % s, (qx + p) // s
            taps = []
            for jh in range(kk):
                for jw in range(kk):
                    hs = dh - jh + Lh
                    ws = dw - jw + Lw
                    taps.append(xp[:, hs:hs + Hq, ws:ws + Wq, :])
            pt = jnp.stack(taps, axis=3)           # (N, Hq, Wq, kk*kk, Cin)
            hv = -(-(Ho - qy) // s)                # valid rows of this phase
            wv = -(-(Wo - qx) // s)
            if hv < Hq or wv < Wq:
                msk = ((jnp.arange(Hq) < hv)[:, None]
                       & (jnp.arange(Wq) < wv)[None, :]).astype(pt.dtype)
                pt = pt * msk[None, :, :, None, None]
            patch_list.append(pt.reshape(N * Hq * Wq, K))
            wsub = w_sp[:, :, rh::s, rw::s]        # (Cin, Cout, kk, kk)
            w_list.append(wsub.transpose(2, 3, 0, 1).reshape(K, Cout))

    patches = jnp.stack(patch_list, axis=0)        # (P, Mq, K)
    w_all = jnp.stack(w_list, axis=0)              # (P, K, Cout)

    # ---- padding / tiling ---------------------------------------------------
    Mq = N * Hq * Wq
    tile_m = min(tile_m, _ceil_to(Mq, 8))
    Mq_pad = _ceil_to(Mq, tile_m)

    Coutp = _ceil_to(Cout, 128)                    # lane-dense output

    if K <= max_tile_k:
        K_pad = _ceil_to(K, 8)
        tk = K_pad
    else:
        tk = max_tile_k                            # multiple of 256 (MXU cadence)
        K_pad = _ceil_to(K, tk)

    patches = jnp.pad(patches, ((0, 0), (0, Mq_pad - Mq), (0, K_pad - K)))
    w_all = jnp.pad(w_all, ((0, 0), (0, K_pad - K), (0, Coutp - Cout)))

    # bf16 operands (MXU native rate, halves HBM traffic); f32 accumulation.
    patches = patches.astype(jnp.bfloat16)
    w_all = w_all.astype(jnp.bfloat16)

    n_m = Mq_pad // tile_m
    n_k = K_pad // tk

    # ---- Pallas kernel 1: per-phase GEMM + BN statistics --------------------
    y_all, stats = pl.pallas_call(
        _conv_stats_kernel,
        out_shape=(jax.ShapeDtypeStruct((P, Mq_pad, Coutp), jnp.bfloat16),
                   jax.ShapeDtypeStruct((P, 8, Coutp), jnp.float32)),
        grid_spec=pltpu.PrefetchScalarGridSpec(
            num_scalar_prefetch=0,
            grid=(P, n_m, n_k),
            in_specs=[
                pl.BlockSpec((None, tile_m, tk), lambda ph, i, kx: (ph, i, kx)),
                pl.BlockSpec((None, tk, Coutp), lambda ph, i, kx: (ph, kx, 0)),
            ],
            out_specs=(
                pl.BlockSpec((None, tile_m, Coutp), lambda ph, i, kx: (ph, i, 0)),
                pl.BlockSpec((None, 8, Coutp), lambda ph, i, kx: (ph, 0, 0)),
            ),
            scratch_shapes=[pltpu.VMEM((tile_m, Coutp), jnp.float32)]),
        compiler_params=pltpu.CompilerParams(
            dimension_semantics=("parallel", "arbitrary", "arbitrary"),
            vmem_limit_bytes=32 * 1024 * 1024),
    )(patches, w_all)

    # ---- fold BatchNorm (training-mode batch stats) into scale/shift --------
    if norm:
        ch_sum = jnp.sum(stats[:, 0, :Cout], axis=0)
        ch_sq = jnp.sum(stats[:, 1, :Cout], axis=0)
        # Divide by the TRUE count M_total, not the padded row count: all
        # padded/masked rows contributed exactly zero to both sums.
        mean = ch_sum / M_total
        # NOTE: E[x^2] - E[x]^2 in f32 can cancel when |mean| >> std; the conv
        # output here is near zero-mean so this is fine, the clamp guards the
        # pathological case.
        var = jnp.maximum(ch_sq / M_total - mean * mean, 0.0)
        inv_std = 1.0 / jnp.sqrt(var + eps)
        scale = gamma.astype(jnp.float32) * inv_std
        shift = beta.astype(jnp.float32) - mean * scale
    else:
        scale = jnp.ones((Cout,), jnp.float32)
        shift = jnp.zeros((Cout,), jnp.float32)
    scale = jnp.pad(scale, (0, Coutp - Cout)).reshape(1, Coutp)
    shift = jnp.pad(shift, (0, Coutp - Cout)).reshape(1, Coutp)

    apply_act = not (isinstance(relu, (list, tuple)) and len(relu) == 0)
    slope = float(relu) if (apply_act and relu > 0) else 0.0

    # ---- Pallas kernel 2: normalization + activation (large lane-dense tiles)
    rows = P * Mq_pad
    n_tiles = rows // tile_m
    f = 1
    for cand in range(min(n_tiles, max(1, 8192 // tile_m)), 0, -1):
        if n_tiles % cand == 0:
            f = cand
            break
    tile_m2 = tile_m * f

    y2d = y_all.reshape(rows, Coutp)
    out2d = pl.pallas_call(
        functools.partial(_norm_act_kernel, apply_act=apply_act, slope=slope),
        out_shape=jax.ShapeDtypeStruct((rows, Coutp), jnp.float32),
        grid_spec=pltpu.PrefetchScalarGridSpec(
            num_scalar_prefetch=0,
            grid=(rows // tile_m2,),
            in_specs=[pl.BlockSpec((tile_m2, Coutp), lambda i: (i, 0)),
                      pl.BlockSpec((1, Coutp), lambda i: (0, 0)),
                      pl.BlockSpec((1, Coutp), lambda i: (0, 0))],
            out_specs=pl.BlockSpec((tile_m2, Coutp), lambda i: (i, 0))),
        compiler_params=pltpu.CompilerParams(
            dimension_semantics=("parallel",),
            vmem_limit_bytes=32 * 1024 * 1024),
    )(y2d, scale, shift)

    # ---- un-phase + NHWC -> NCHW (single XLA pass) ---------------------------
    out = out2d.reshape(P, Mq_pad, Coutp)[:, :Mq, :Cout]
    out = out.reshape(s, s, N, Hq, Wq, Cout)
    out = out.transpose(2, 5, 3, 0, 4, 1).reshape(N, Cout, Hq * s, Wq * s)
    return out[:, :, :Ho, :Wo]


# ----------------------------------------------------------------------------
# Reference (independent: lax conv, emulating the same bf16 input rounding)
# ----------------------------------------------------------------------------
def _reference(x, weight, gamma, beta, *, kernel_size, stride, padding,
               output_padding, norm, relu, eps=1e-5):
    k, s, p, op = kernel_size, stride, padding, output_padding
    xb = x.astype(jnp.bfloat16).astype(jnp.float32)
    wb = weight.astype(jnp.bfloat16).astype(jnp.float32)
    wk = jnp.flip(wb, axis=(2, 3)).transpose(1, 0, 2, 3)   # (Cout, Cin, k, k)
    pad = k - 1 - p
    y = jax.lax.conv_general_dilated(
        xb, wk, window_strides=(1, 1),
        padding=((pad, pad + op), (pad, pad + op)),
        lhs_dilation=(s, s),
        dimension_numbers=("NCHW", "OIHW", "NCHW"),
        precision=jax.lax.Precision.HIGHEST)
    if norm:
        mu = jnp.mean(y, axis=(0, 2, 3), keepdims=True)
        var = jnp.mean((y - mu) ** 2, axis=(0, 2, 3), keepdims=True)
        y = (y - mu) / jnp.sqrt(var + eps)
        y = y * gamma.reshape(1, -1, 1, 1) + beta.reshape(1, -1, 1, 1)
    apply_act = not (isinstance(relu, (list, tuple)) and len(relu) == 0)
    if apply_act:
        slope = float(relu) if relu > 0 else 0.0
        y = jnp.where(y >= 0, y, slope * y)
    return y


# ----------------------------------------------------------------------------
# Demo / self-test
# ----------------------------------------------------------------------------
if __name__ == "__main__":
    key = jax.random.PRNGKey(0)

    configs = [
        # typical decoder block: k=4, s=2, p=1, BN + LeakyReLU(0.2)
        dict(N=2, Cin=4, H=16, W=16, Cout=8, k=4, s=2, p=1, op=0,
             norm=True, relu=0.2),
        # stride-1 path + plain ReLU
        dict(N=2, Cin=4, H=16, W=16, Cout=16, k=3, s=1, p=1, op=0,
             norm=True, relu=0),
        # ragged phases (Ho odd), zero-padded sub-kernel taps, no activation
        dict(N=1, Cin=3, H=8, W=8, Cout=5, k=3, s=2, p=1, op=0,
             norm=True, relu=()),
    ]

    for cfg in configs:
        key, kx, kw, kg, kb = jax.random.split(key, 5)
        x = jax.random.normal(kx, (cfg["N"], cfg["Cin"], cfg["H"], cfg["W"]),
                              dtype=jnp.float32)
        weight = 0.1 * jax.random.normal(
            kw, (cfg["Cin"], cfg["Cout"], cfg["k"], cfg["k"]),
            dtype=jnp.float32)
        gamma = 1.0 + 0.1 * jax.random.normal(kg, (cfg["Cout"],), jnp.float32)
        beta = 0.1 * jax.random.normal(kb, (cfg["Cout"],), jnp.float32)

        out = decbr2d_forward(
            x, weight, gamma, beta, kernel_size=cfg["k"], stride=cfg["s"],
            padding=cfg["p"], output_padding=cfg["op"], norm=cfg["norm"],
            relu=cfg["relu"])
        out = jax.block_until_ready(out)

        Ho = (cfg["H"] - 1) * cfg["s"] - 2 * cfg["p"] + cfg["k"] + cfg["op"]
        Wo = (cfg["W"] - 1) * cfg["s"] - 2 * cfg["p"] + cfg["k"] + cfg["op"]
        assert out.shape == (cfg["N"], cfg["Cout"], Ho, Wo), out.shape

        ref = _reference(x, weight, gamma, beta, kernel_size=cfg["k"],
                         stride=cfg["s"], padding=cfg["p"],
                         output_padding=cfg["op"], norm=cfg["norm"],
                         relu=cfg["relu"])
        max_err = float(jnp.max(jnp.abs(out - ref)))
        assert max_err < 5e-2, f"config {cfg}: max abs err {max_err}"

    print("KERNEL_OK")
</pallas_src>

<mosaic_0001>
module attributes {stable_mosaic.version = 11 : i64} {
  func.func @_conv_stats_kernel(%arg0: i32, %arg1: i32, %arg2: i32, %arg3: memref<1x512x16xbf16, #tpu.memory_space<vmem>>, %arg4: memref<1x16x128xbf16, #tpu.memory_space<vmem>>, %arg5: memref<1x512x128xbf16, #tpu.memory_space<vmem>>, %arg6: memref<1x8x128xf32, #tpu.memory_space<vmem>>, %arg7: memref<512x128xf32, #tpu.memory_space<vmem>>) attributes {dimension_semantics = [#tpu.dimension_semantics<parallel>, #tpu.dimension_semantics<arbitrary>, #tpu.dimension_semantics<arbitrary>], iteration_bounds = array<i64: 4, 1, 1>, scalar_prefetch = 0 : i64, scratch_operands = 1 : i64, tpu.core_type = #tpu.core_type<tc>, window_params = [{transform_indices = @transform_0, window_bounds = array<i64: 1, 512, 16>}, {transform_indices = @transform_1, window_bounds = array<i64: 1, 16, 128>}, {transform_indices = @transform_2, window_bounds = array<i64: 1, 512, 128>}, {transform_indices = @transform_3, window_bounds = array<i64: 1, 8, 128>}]} {
    %c0_i32 = arith.constant 0 : i32
    %0 = arith.cmpi eq, %arg2, %c0_i32 : i32
    %1 = arith.extui %0 : i1 to i32
    %c0_i32_0 = arith.constant 0 : i32
    %2 = arith.cmpi ne, %1, %c0_i32_0 : i32
    scf.if %2 {
      %cst_15 = arith.constant 0.000000e+00 : f32
      %19 = vector.broadcast %cst_15 : f32 to vector<512x128xf32>
      %c0_16 = arith.constant 0 : index
      %c0_17 = arith.constant 0 : index
      %20 = vector.load %arg7[%c0_16, %c0_17] : memref<512x128xf32, #tpu.memory_space<vmem>>, vector<512x128xf32>
      tpu.vector_store %arg7[%c0_16, %c0_17], %19 {strides = array<i32>} : memref<512x128xf32, #tpu.memory_space<vmem>>, vector<512x128xf32>,
    } else {
    }
    %c0 = arith.constant 0 : index
    %c0_1 = arith.constant 0 : index
    %3 = vector.load %arg7[%c0, %c0_1] : memref<512x128xf32, #tpu.memory_space<vmem>>, vector<512x128xf32>
    %c0_2 = arith.constant 0 : index
    %c0_3 = arith.constant 0 : index
    %c0_4 = arith.constant 0 : index
    %4 = vector.load %arg3[%c0_2, %c0_3, %c0_4] : memref<1x512x16xbf16, #tpu.memory_space<vmem>>, vector<1x512x16xbf16>
    %5 = vector.shape_cast %4 : vector<1x512x16xbf16> to vector<512x16xbf16>
    %c0_5 = arith.constant 0 : index
    %c0_6 = arith.constant 0 : index
    %c0_7 = arith.constant 0 : index
    %6 = vector.load %arg4[%c0_5, %c0_6, %c0_7] : memref<1x16x128xbf16, #tpu.memory_space<vmem>>, vector<1x16x128xbf16>
    %7 = vector.shape_cast %6 : vector<1x16x128xbf16> to vector<16x128xbf16>
    %cst = arith.constant dense<0.000000e+00> : vector<512x128xf32>
    %8 = tpu.matmul %5, %7, %cst {dimension_numbers = #tpu.dot_dimension_numbers<[1], [0], [0], [1], [0, 0, 1, 1], [], []>} : vector<512x16xbf16>, vector<16x128xbf16>, vector<512x128xf32> -> vector<512x128xf32>
    %9 = arith.addf %3, %8 : vector<512x128xf32>
    %c0_8 = arith.constant 0 : index
    %c0_9 = arith.constant 0 : index
    %10 = vector.load %arg7[%c0_8, %c0_9] : memref<512x128xf32, #tpu.memory_space<vmem>>, vector<512x128xf32>
    tpu.vector_store %arg7[%c0_8, %c0_9], %9 {strides = array<i32>} : memref<512x128xf32, #tpu.memory_space<vmem>>, vector<512x128xf32>,
    %c0_i32_10 = arith.constant 0 : i32
    %11 = arith.cmpi eq, %arg1, %c0_i32_10 : i32
    %c0_i32_11 = arith.constant 0 : i32
    %12 = arith.cmpi eq, %arg2, %c0_i32_11 : i32
    %13 = arith.andi %11, %12 : i1
    %14 = arith.extui %13 : i1 to i32
    %c0_i32_12 = arith.constant 0 : i32
    %15 = arith.cmpi ne, %14, %c0_i32_12 : i32
    scf.if %15 {
      %cst_15 = arith.constant 0.000000e+00 : f32
      %19 = vector.broadcast %cst_15 : f32 to vector<8x128xf32>
      %c0_16 = arith.constant 0 : index
      %c0_17 = arith.constant 0 : index
      %c0_18 = arith.constant 0 : index
      %20 = vector.load %arg6[%c0_16, %c0_17, %c0_18] : memref<1x8x128xf32, #tpu.memory_space<vmem>>, vector<1x8x128xf32>
      %21 = vector.shape_cast %20 : vector<1x8x128xf32> to vector<8x128xf32>
      %22 = vector.shape_cast %19 : vector<8x128xf32> to vector<1x8x128xf32>
      tpu.vector_store %arg6[%c0_16, %c0_17, %c0_18], %22 {strides = array<i32>} : memref<1x8x128xf32, #tpu.memory_space<vmem>>, vector<1x8x128xf32>,
    } else {
    }
    %c0_i32_13 = arith.constant 0 : i32
    %16 = arith.cmpi eq, %arg2, %c0_i32_13 : i32
    %17 = arith.extui %16 : i1 to i32
    %c0_i32_14 = arith.constant 0 : i32
    %18 = arith.cmpi ne, %17, %c0_i32_14 : i32
    scf.if %18 {
      %c0_15 = arith.constant 0 : index
      %c0_16 = arith.constant 0 : index
      %19 = vector.load %arg7[%c0_15, %c0_16] : memref<512x128xf32, #tpu.memory_space<vmem>>, vector<512x128xf32>
      %20 = arith.truncf %19 : vector<512x128xf32> to vector<512x128xbf16>
      %c0_17 = arith.constant 0 : index
      %c0_18 = arith.constant 0 : index
      %c0_19 = arith.constant 0 : index
      %21 = vector.load %arg5[%c0_17, %c0_18, %c0_19] : memref<1x512x128xbf16, #tpu.memory_space<vmem>>, vector<1x512x128xbf16>
      %22 = vector.shape_cast %21 : vector<1x512x128xbf16> to vector<512x128xbf16>
      %23 = vector.shape_cast %20 : vector<512x128xbf16> to vector<1x512x128xbf16>
      tpu.vector_store %arg5[%c0_17, %c0_18, %c0_19], %23 {strides = array<i32>} : memref<1x512x128xbf16, #tpu.memory_space<vmem>>, vector<1x512x128xbf16>,
      %c0_20 = arith.constant 0 : index
      %c0_21 = arith.constant 0 : index
      %c0_22 = arith.constant 0 : index
      %24 = vector.load %arg6[%c0_20, %c0_21, %c0_22] : memref<1x8x128xf32, #tpu.memory_space<vmem>>, vector<1x1x128xf32>
      %25 = vector.shape_cast %24 : vector<1x1x128xf32> to vector<1x128xf32>
      %cst_23 = arith.constant dense<0.000000e+00> : vector<128xf32>
      %26 = vector.multi_reduction <add>, %19, %cst_23 [0] : vector<512x128xf32> to vector<128xf32>
      %27 = vector.shape_cast %26 : vector<128xf32> to vector<1x128xf32>
      %28 = arith.addf %25, %27 : vector<1x128xf32>
      %c0_24 = arith.constant 0 : index
      %c0_25 = arith.constant 0 : index
      %c0_26 = arith.constant 0 : index
      %29 = vector.load %arg6[%c0_24, %c0_25, %c0_26] : memref<1x8x128xf32, #tpu.memory_space<vmem>>, vector<1x1x128xf32>
      %30 = vector.shape_cast %29 : vector<1x1x128xf32> to vector<1x128xf32>
      %31 = vector.shape_cast %28 : vector<1x128xf32> to vector<1x1x128xf32>
      tpu.vector_store %arg6[%c0_24, %c0_25, %c0_26], %31 {strides = array<i32>} : memref<1x8x128xf32, #tpu.memory_space<vmem>>, vector<1x1x128xf32>,
      %c0_27 = arith.constant 0 : index
      %c1 = arith.constant 1 : index
      %c0_28 = arith.constant 0 : index
      %32 = vector.load %arg6[%c0_27, %c1, %c0_28] : memref<1x8x128xf32, #tpu.memory_space<vmem>>, vector<1x1x128xf32>
      %33 = vector.shape_cast %32 : vector<1x1x128xf32> to vector<1x128xf32>
      %34 = arith.mulf %19, %19 : vector<512x128xf32>
      %cst_29 = arith.constant dense<0.000000e+00> : vector<128xf32>
      %35 = vector.multi_reduction <add>, %34, %cst_29 [0] : vector<512x128xf32> to vector<128xf32>
      %36 = vector.shape_cast %35 : vector<128xf32> to vector<1x128xf32>
      %37 = arith.addf %33, %36 : vector<1x128xf32>
      %c0_30 = arith.constant 0 : index
      %c1_31 = arith.constant 1 : index
      %c0_32 = arith.constant 0 : index
      %38 = vector.load %arg6[%c0_30, %c1_31, %c0_32] : memref<1x8x128xf32, #tpu.memory_space<vmem>>, vector<1x1x128xf32>
      %39 = vector.shape_cast %38 : vector<1x1x128xf32> to vector<1x128xf32>
      %40 = vector.shape_cast %37 : vector<1x128xf32> to vector<1x1x128xf32>
      tpu.vector_store %arg6[%c0_30, %c1_31, %c0_32], %40 {strides = array<i32>} : memref<1x8x128xf32, #tpu.memory_space<vmem>>, vector<1x1x128xf32>,
    } else {
    }
    return
  }
  func.func @transform_0(%arg0: i32, %arg1: i32, %arg2: i32) -> (i32, i32, i32) {
    %c0_i32 = arith.constant 0 : i32
    return %arg0, %arg1, %arg2 : i32, i32, i32
  }
  func.func @transform_1(%arg0: i32, %arg1: i32, %arg2: i32) -> (i32, i32, i32) {
    %c0_i32 = arith.constant 0 : i32
    %c0_i32_0 = arith.constant 0 : i32
    return %arg0, %arg2, %c0_i32 : i32, i32, i32
  }
  func.func @transform_2(%arg0: i32, %arg1: i32, %arg2: i32) -> (i32, i32, i32) {
    %c0_i32 = arith.constant 0 : i32
    %c0_i32_0 = arith.constant 0 : i32
    return %arg0, %arg1, %c0_i32 : i32, i32, i32
  }
  func.func @transform_3(%arg0: i32, %arg1: i32, %arg2: i32) -> (i32, i32, i32) {
    %c0_i32 = arith.constant 0 : i32
    %c0_i32_0 = arith.constant 0 : i32
    %c0_i32_1 = arith.constant 0 : i32
    return %arg0, %c0_i32, %c0_i32_0 : i32, i32, i32
  }
}

</mosaic_0001>

<llo_original>
// kernel: tpu_custom_call.1
$region0: #{tpu_custom_call.1}
  #allocation0 [shape = 'u32[]', space=smem, size = 0x4, offset = 0x4, fixed_abs, tag = 'smem constant byte address 0x4 - core index']
  #allocation1 [shape = 'u32[144,128]{1,0:T(1,128)}', space=vmem, size = 0x12000, scoped, tag = 'internal scratch']
  #allocation2 [shape = 'f32[512,128]{1,0:T(8,128)}', space=vmem, size = 0x40000, scoped, tag = 'scratch operand']
  %s0 = inlined_call_operand.vmem [shape: bf16[4,512,16], index: 0, kind: input, shape index: {}]
  %s1 = inlined_call_operand.vmem [shape: bf16[4,16,128], index: 1, kind: input, shape index: {}]
  %s2 = inlined_call_operand.hbm [shape: bf16[4,512,128], index: 2, kind: output, shape index: {0}]
  %s3 = inlined_call_operand.hbm [shape: f32[4,8,128], index: 3, kind: output, shape index: {1}]
  %4 = xla_tuple %s2, %s3
  %s5 = sld [smem:[#allocation0]]
  $region61: #{tpu_custom_call.1} parent=0
    _
  %s7 = ssub.s32 1, %s5
  %s8 = scalar_select 0, %s7, %s5
  $region1: #{tpu_custom_call.1} parent=0
    #allocation3 [shape = 'u8[262144]{0}', space=vmem, size = 0x40000, scoped, tag = 'output window, operand 0']
    #allocation4 [shape = 's32[2]{0}', space=sflag, size = 0x8, scoped, tag = 'scoped memory for tpu_custom_call.1']
    #allocation5 [shape = 'u8[8192]{0}', space=vmem, size = 0x2000, scoped, tag = 'output window, operand 1']
    #allocation6 [shape = 's32[2]{0}', space=sflag, size = 0x8, scoped, tag = 'scoped memory for tpu_custom_call.1']
    %9 = vsyncpa [#allocation4], 0
    %s10 = scalar_lea.sflag [#allocation4], 1
    %11 = vsyncpa %s10, 0
    %12 = vsyncpa [#allocation6], 0
    %s13 = scalar_lea.sflag [#allocation6], 1
    %14 = vsyncpa %s13, 0
    loop: start=0, step=1, limit=6
    $region2: #{tpu_custom_call.1} parent=1 // loop_pre_header
      _
    $region3: #{tpu_custom_call.1} parent=1 // loop_header
      %s16 = sphi 0, %s20
      %p17 = scmp.ge.s32.totalorder %s16, 6
      %s23 = sphi 0, %s42
      %s24 = sphi 0, %s38
      %s25 = sphi 0, %s34
      %s26 = sphi 0, %s23
      %s27 = sphi 0, %s24
      %s28 = sphi 0, %s25
      %s29 = sphi 0, %s26
      %s30 = sphi 0, %s27
      %s31 = sphi 0, %s28
      %s49 = sphi 0, %s51
      %s52 = sphi 0, %s49
      %s53 = sphi 0, %s52
      %s69 = sphi 0, %s53
      %s77 = sphi 0, %s79
      %s80 = sphi 0, %s77
      %s81 = sphi 0, %s80
      %s97 = sphi 0, %s81
      %s105 = sphi 0, %s107
      %s108 = sphi 0, %s105
      %s109 = sphi 0, %s108
      %s125 = sphi 0, %s109
      %s131 = sphi 0, %s133
      %s134 = sphi 0, %s131
      %s135 = sphi 0, %s134
      %s151 = sphi 0, %s135
    $region4: #{tpu_custom_call.1} parent=1 // loop_header_branch
      %19 = sbr.rel (%p17) target = $region8
    $region5: #{tpu_custom_call.1} parent=1 // loop_body
      %s21 = ssub.s32 %s16, 1
      %s22 = ssub.s32 %s16, 2
      %s32 = sadd.s32 1, %s25
      %p33 = scmp.ge.s32.totalorder %s32, 1
      %s34 = scalar_select %p33, 0, %s32
      %s35 = sadd.s32 1, %s24
      %s36 = scalar_select %p33, %s35, %s24
      %p37 = scmp.ge.s32.totalorder %s36, 1
      %s38 = scalar_select %p37, 0, %s36
      %s39 = sadd.s32 1, %s23
      %s40 = scalar_select %p37, %s39, %s23
      %p41 = scmp.ge.s32.totalorder %s40, 4
      %s42 = scalar_select %p41, 0, %s40
      %s43 = ssub.s32 %s23, %s42
      %s44 = ssub.s32 %s24, %s38
      %s45 = sor.u32 %s43, %s44
      %s46 = ssub.s32 %s25, %s34
      %s47 = sor.u32 %s45, %s46
      %p48 = scmp.eq.s32.totalorder %s47, 0
      %s50 = sadd.s32 %s49, 1
      %s51 = scalar_select %p48, %s49, %s50
      %p54 = pneg %p48
      %p55 = scmp.eq.s32.totalorder %s16, 3
      %p56 = por %p54, %p55
      %p57 = scmp.ne.s32.totalorder %s49, %s52
      %p58 = scmp.eq.s32.totalorder %s16, 0
      %p59 = por %p57, %p58
      %p60 = scmp.ne.s32.totalorder %s49, %s52
      %p61 = scmp.eq.s32.totalorder %s21, 3
      %p62 = por %p60, %p61
      %p63 = scmp.ne.s32.totalorder %s52, %s53
      %p64 = scmp.eq.s32.totalorder %s21, 0
      %p65 = por %p63, %p64
      %p66 = scmp.ne.s32.totalorder %s52, %s53
      %p67 = scmp.eq.s32.totalorder %s22, 3
      %p68 = por %p66, %p67
      %p70 = scmp.ne.s32.totalorder %s53, %s69
      %p71 = scmp.eq.s32.totalorder %s22, 0
      %p72 = por %p70, %p71
      %s73 = ssub.s32 %s23, %s42
      %s74 = ssub.s32 %s25, %s34
      %s75 = sor.u32 %s73, %s74
      %p76 = scmp.eq.s32.totalorder %s75, 0
      %s78 = sadd.s32 %s77, 1
      %s79 = scalar_select %p76, %s77, %s78
      %p82 = pneg %p76
      %p83 = scmp.eq.s32.totalorder %s16, 3
      %p84 = por %p82, %p83
      %p85 = scmp.ne.s32.totalorder %s77, %s80
      %p86 = scmp.eq.s32.totalorder %s16, 0
      %p87 = por %p85, %p86
      %p88 = scmp.ne.s32.totalorder %s77, %s80
      %p89 = scmp.eq.s32.totalorder %s21, 3
      %p90 = por %p88, %p89
      %p91 = scmp.ne.s32.totalorder %s80, %s81
      %p92 = scmp.eq.s32.totalorder %s21, 0
      %p93 = por %p91, %p92
      %p94 = scmp.ne.s32.totalorder %s80, %s81
      %p95 = scmp.eq.s32.totalorder %s22, 3
      %p96 = por %p94, %p95
      %p98 = scmp.ne.s32.totalorder %s81, %s97
      %p99 = scmp.eq.s32.totalorder %s22, 0
      %p100 = por %p98, %p99
      %s101 = ssub.s32 %s23, %s42
      %s102 = ssub.s32 %s24, %s38
      %s103 = sor.u32 %s101, %s102
      %p104 = scmp.eq.s32.totalorder %s103, 0
      %s106 = sadd.s32 %s105, 1
      %s107 = scalar_select %p104, %s105, %s106
      %p110 = pneg %p104
      %p111 = scmp.eq.s32.totalorder %s16, 3
      %p112 = por %p110, %p111
      %p113 = scmp.ne.s32.totalorder %s105, %s108
      %p114 = scmp.eq.s32.totalorder %s16, 0
      %p115 = por %p113, %p114
      %p116 = scmp.ne.s32.totalorder %s105, %s108
      %p117 = scmp.eq.s32.totalorder %s21, 3
      %p118 = por %p116, %p117
      %p119 = scmp.ne.s32.totalorder %s108, %s109
      %p120 = scmp.eq.s32.totalorder %s21, 0
      %p121 = por %p119, %p120
      %p122 = scmp.ne.s32.totalorder %s108, %s109
      %p123 = scmp.eq.s32.totalorder %s22, 3
      %p124 = por %p122, %p123
      %p126 = scmp.ne.s32.totalorder %s109, %s125
      %p127 = scmp.eq.s32.totalorder %s22, 0
      %p128 = por %p126, %p127
      %s129 = ssub.s32 %s23, %s42
      %p130 = scmp.eq.s32.totalorder %s129, 0
      %s132 = sadd.s32 %s131, 1
      %s133 = scalar_select %p130, %s131, %s132
      %p136 = pneg %p130
      %p137 = scmp.eq.s32.totalorder %s16, 3
      %p138 = por %p136, %p137
      %p139 = scmp.ne.s32.totalorder %s131, %s134
      %p140 = scmp.eq.s32.totalorder %s16, 0
      %p141 = por %p139, %p140
      %p142 = scmp.ne.s32.totalorder %s131, %s134
      %p143 = scmp.eq.s32.totalorder %s21, 3
      %p144 = por %p142, %p143
      %p145 = scmp.ne.s32.totalorder %s134, %s135
      %p146 = scmp.eq.s32.totalorder %s21, 0
      %p147 = por %p145, %p146
      %p148 = scmp.ne.s32.totalorder %s134, %s135
      %p149 = scmp.eq.s32.totalorder %s22, 3
      %p150 = por %p148, %p149
      %p152 = scmp.ne.s32.totalorder %s135, %s151
      %p153 = scmp.eq.s32.totalorder %s22, 0
      %p154 = por %p152, %p153
      %p155 = scmp.le.s32.totalorder 1, %s16
      %p156 = scmp.lt.s32.totalorder %s16, 5
      %p157 = pnand %p155, %p156
      %p158 = pneg %p157
      // Predicated region
      $region9: #{tpu_custom_call.1} parent=5 // pred_check
        _
      $region10: #{tpu_custom_call.1} parent=5 // pred_check_branch
        %160 = sbr.rel (%p157) target = $region12
      $region11: #{tpu_custom_call.1} parent=5 // pred_region
        %s161 = ssub.s32 %s16, 1
      $region12: #{tpu_custom_call.1} parent=5 // pred_fallthru
        _
      %p162 = scmp.lt.s32.totalorder %s16, 4
      // Predicated region
      $region13: #{tpu_custom_call.1} parent=5 // pred_check
        %p163 = pneg %p162
      $region14: #{tpu_custom_call.1} parent=5 // pred_check_branch
        %165 = sbr.rel (%p163) target = $region16
      $region15: #{tpu_custom_call.1} parent=5 // pred_region
        // Predicated region
        $region17: #{tpu_custom_call.1} parent=15 // pred_check
          %p166 = pneg %p59
        $region18: #{tpu_custom_call.1} parent=15 // pred_check_branch
          %168 = sbr.rel (%p166) target = $region20
        $region19: #{tpu_custom_call.1} parent=15 // pred_region
          %s169 = smul.u32 64, %s24
          %p170 = scmp.lt.s32.totalorder %s23, 3
          %s171 = scalar_select %p170, %s23, 3
          %p172 = scmp.lt.s32.totalorder %s169, 63
          %s173 = scalar_select %p172, %s169, 63
          %p174 = scmp.lt.s32.totalorder %s25, 0
          %s175 = scalar_select %p174, %s25, 0
          %s176 = sadd.s32 %s175, %s173
          %s177 = smul.addr %s171, 64
          %s178 = sadd.s32 %s176, %s177
          %s179 = smul.addr %s178, 4
          %s180 = scalar_lea.vmem %s0, %s179
          %s181 = smul.u32 64, %s24
        $region20: #{tpu_custom_call.1} parent=15 // pred_fallthru
          _
        // Predicated region
        $region21: #{tpu_custom_call.1} parent=15 // pred_check
          %p182 = pneg %p87
        $region22: #{tpu_custom_call.1} parent=15 // pred_check_branch
          %184 = sbr.rel (%p182) target = $region24
        $region23: #{tpu_custom_call.1} parent=15 // pred_region
          %s185 = smul.u32 2, %s25
          %p186 = scmp.lt.s32.totalorder %s23, 3
          %s187 = scalar_select %p186, %s23, 3
          %p188 = scmp.lt.s32.totalorder %s185, 1
          %s189 = scalar_select %p188, %s185, 1
          %s190 = smul.addr %s187, 2
          %s191 = sadd.s32 %s189, %s190
          %s192 = smul.addr %s191, 4
          %s193 = scalar_lea.vmem %s1, %s192
          %s194 = smul.u32 2, %s25
        $region24: #{tpu_custom_call.1} parent=15 // pred_fallthru
          _
      $region16: #{tpu_custom_call.1} parent=5 // pred_fallthru
        _
      %p195 = scmp.le.s32.totalorder 1, %s16
      %p196 = scmp.lt.s32.totalorder %s16, 5
      %p197 = pnand %p195, %p196
      %p198 = pneg %p197
      // Predicated region
      $region25: #{tpu_custom_call.1} parent=5 // pred_check
        _
      $region26: #{tpu_custom_call.1} parent=5 // pred_check_branch
        %200 = sbr.rel (%p197) target = $region28
      $region27: #{tpu_custom_call.1} parent=5 // pred_region
        %s201 = ssub.s32 %s16, 1
        %s202 = smul.u32 64, %s27
        %p203 = scmp.lt.s32.totalorder %s26, 3
        %s204 = scalar_select %p203, %s26, 3
        %p205 = scmp.lt.s32.totalorder %s202, 63
        %s206 = scalar_select %p205, %s202, 63
        %p207 = scmp.lt.s32.totalorder %s28, 0
        %s208 = scalar_select %p207, %s28, 0
        %s209 = sadd.s32 %s208, %s206
        %s210 = smul.addr %s204, 64
        %s211 = sadd.s32 %s209, %s210
        %s212 = smul.addr %s211, 4
        %s213 = scalar_lea.vmem %s0, %s212
        %p214 = pneg %p65
        %p215 = pneg %p62
        %s216 = smul.u32 2, %s28
        %p217 = scmp.lt.s32.totalorder %s26, 3
        %s218 = scalar_select %p217, %s26, 3
        %p219 = scmp.lt.s32.totalorder %s216, 1
        %s220 = scalar_select %p219, %s216, 1
        %s221 = smul.addr %s218, 2
        %s222 = sadd.s32 %s220, %s221
        %s223 = smul.addr %s222, 4
        %s224 = scalar_lea.vmem %s1, %s223
        %p225 = pneg %p93
        %p226 = pneg %p90
        %p227 = pneg %p121
        %p228 = pneg %p118
        %s229 = sand.u32 %s108, 1
        %s230 = scalar_lea.sflag [#allocation4], %s229
        %s231 = sand.u32 %s108, 1
        %s232 = smul.addr %s231, 256
        %s233 = scalar_lea.vmem [#allocation3], %s232
        %p234 = pneg %p147
        %p235 = pneg %p144
        %s236 = sand.u32 %s134, 1
        %s237 = scalar_lea.sflag [#allocation6], %s236
        %s238 = sand.u32 %s134, 1
        %s239 = smul.addr %s238, 8
        %s240 = scalar_lea.vmem [#allocation5], %s239
        %s241 = smul.u32 64, %s27
        %p242 = scmp.lt.s32.totalorder %s26, 3
        %s243 = scalar_select %p242, %s26, 3
        %p244 = scmp.lt.s32.totalorder %s241, 63
        %s245 = scalar_select %p244, %s241, 63
        %p246 = scmp.lt.s32.totalorder %s28, 0
        %s247 = scalar_select %p246, %s28, 0
        %s248 = sadd.s32 %s247, %s245
        %s249 = smul.addr %s243, 64
        %s250 = sadd.s32 %s248, %s249
        %s251 = smul.addr %s250, 4
        %s252 = scalar_lea.vmem %s0, %s251
        %s253 = smul.u32 64, %s27
        %s254 = smul.u32 2, %s28
        %p255 = scmp.lt.s32.totalorder %s26, 3
        %s256 = scalar_select %p255, %s26, 3
        %p257 = scmp.lt.s32.totalorder %s254, 1
        %s258 = scalar_select %p257, %s254, 1
        %s259 = smul.addr %s256, 2
        %s260 = sadd.s32 %s258, %s259
        %s261 = smul.addr %s260, 4
        %s262 = scalar_lea.vmem %s1, %s261
        %s263 = smul.u32 2, %s28
        %s264 = smul.u32 64, %s27
        %p266 = scmp.eq.s32.totalorder %s28, 0
        // Predicated region
        $region29: #{tpu_custom_call.1} parent=27 // pred_check
          %p267 = pneg %p266
        $region30: #{tpu_custom_call.1} parent=27 // pred_check_branch
          %269 = sbr.rel (%p267) target = $region32
        $region31: #{tpu_custom_call.1} parent=27 // pred_region
          %270 = vst [vmem:[#allocation2] sm:$0xff] 0.0
          %271 = vst [vmem:[#allocation2 + $0x8] sm:$0xff] 0.0
          %272 = vst [vmem:[#allocation2 + $0x10] sm:$0xff] 0.0
          %273 = vst [vmem:[#allocation2 + $0x18] sm:$0xff] 0.0
          %274 = vst [vmem:[#allocation2 + $0x20] sm:$0xff] 0.0
          %275 = vst [vmem:[#allocation2 + $0x28] sm:$0xff] 0.0
          %276 = vst [vmem:[#allocation2 + $0x30] sm:$0xff] 0.0
          %277 = vst [vmem:[#allocation2 + $0x38] sm:$0xff] 0.0
          %278 = vst [vmem:[#allocation2 + $0x40] sm:$0xff] 0.0
          %279 = vst [vmem:[#allocation2 + $0x48] sm:$0xff] 0.0
          %280 = vst [vmem:[#allocation2 + $0x50] sm:$0xff] 0.0
          %281 = vst [vmem:[#allocation2 + $0x58] sm:$0xff] 0.0
          %282 = vst [vmem:[#allocation2 + $0x60] sm:$0xff] 0.0
          %283 = vst [vmem:[#allocation2 + $0x68] sm:$0xff] 0.0
          %284 = vst [vmem:[#allocation2 + $0x70] sm:$0xff] 0.0
          %285 = vst [vmem:[#allocation2 + $0x78] sm:$0xff] 0.0
          %286 = vst [vmem:[#allocation2 + $0x80] sm:$0xff] 0.0
          %287 = vst [vmem:[#allocation2 + $0x88] sm:$0xff] 0.0
          %288 = vst [vmem:[#allocation2 + $0x90] sm:$0xff] 0.0
          %289 = vst [vmem:[#allocation2 + $0x98] sm:$0xff] 0.0
          %290 = vst [vmem:[#allocation2 + $0xa0] sm:$0xff] 0.0
          %291 = vst [vmem:[#allocation2 + $0xa8] sm:$0xff] 0.0
          %292 = vst [vmem:[#allocation2 + $0xb0] sm:$0xff] 0.0
          %293 = vst [vmem:[#allocation2 + $0xb8] sm:$0xff] 0.0
          %294 = vst [vmem:[#allocation2 + $0xc0] sm:$0xff] 0.0
          %295 = vst [vmem:[#allocation2 + $0xc8] sm:$0xff] 0.0
          %296 = vst [vmem:[#allocation2 + $0xd0] sm:$0xff] 0.0
          %297 = vst [vmem:[#allocation2 + $0xd8] sm:$0xff] 0.0
          %298 = vst [vmem:[#allocation2 + $0xe0] sm:$0xff] 0.0
          %299 = vst [vmem:[#allocation2 + $0xe8] sm:$0xff] 0.0
          %300 = vst [vmem:[#allocation2 + $0xf0] sm:$0xff] 0.0
          %301 = vst [vmem:[#allocation2 + $0xf8] sm:$0xff] 0.0
          %302 = vst [vmem:[#allocation2 + $0x100] sm:$0xff] 0.0
          %303 = vst [vmem:[#allocation2 + $0x108] sm:$0xff] 0.0
          %304 = vst [vmem:[#allocation2 + $0x110] sm:$0xff] 0.0
          %305 = vst [vmem:[#allocation2 + $0x118] sm:$0xff] 0.0
          %306 = vst [vmem:[#allocation2 + $0x120] sm:$0xff] 0.0
          %307 = vst [vmem:[#allocation2 + $0x128] sm:$0xff] 0.0
          %308 = vst [vmem:[#allocation2 + $0x130] sm:$0xff] 0.0
          %309 = vst [vmem:[#allocation2 + $0x138] sm:$0xff] 0.0
          %310 = vst [vmem:[#allocation2 + $0x140] sm:$0xff] 0.0
          %311 = vst [vmem:[#allocation2 + $0x148] sm:$0xff] 0.0
          %312 = vst [vmem:[#allocation2 + $0x150] sm:$0xff] 0.0
          %313 = vst [vmem:[#allocation2 + $0x158] sm:$0xff] 0.0
          %314 = vst [vmem:[#allocation2 + $0x160] sm:$0xff] 0.0
          %315 = vst [vmem:[#allocation2 + $0x168] sm:$0xff] 0.0
          %316 = vst [vmem:[#allocation2 + $0x170] sm:$0xff] 0.0
          %317 = vst [vmem:[#allocation2 + $0x178] sm:$0xff] 0.0
          %318 = vst [vmem:[#allocation2 + $0x180] sm:$0xff] 0.0
          %319 = vst [vmem:[#allocation2 + $0x188] sm:$0xff] 0.0
          %320 = vst [vmem:[#allocation2 + $0x190] sm:$0xff] 0.0
          %321 = vst [vmem:[#allocation2 + $0x198] sm:$0xff] 0.0
          %322 = vst [vmem:[#allocation2 + $0x1a0] sm:$0xff] 0.0
          %323 = vst [vmem:[#allocation2 + $0x1a8] sm:$0xff] 0.0
          %324 = vst [vmem:[#allocation2 + $0x1b0] sm:$0xff] 0.0
          %325 = vst [vmem:[#allocation2 + $0x1b8] sm:$0xff] 0.0
          %326 = vst [vmem:[#allocation2 + $0x1c0] sm:$0xff] 0.0
          %327 = vst [vmem:[#allocation2 + $0x1c8] sm:$0xff] 0.0
          %328 = vst [vmem:[#allocation2 + $0x1d0] sm:$0xff] 0.0
          %329 = vst [vmem:[#allocation2 + $0x1d8] sm:$0xff] 0.0
          %330 = vst [vmem:[#allocation2 + $0x1e0] sm:$0xff] 0.0
          %331 = vst [vmem:[#allocation2 + $0x1e8] sm:$0xff] 0.0
          %332 = vst [vmem:[#allocation2 + $0x1f0] sm:$0xff] 0.0
          %333 = vst [vmem:[#allocation2 + $0x1f8] sm:$0xff] 0.0
        $region32: #{tpu_custom_call.1} parent=27 // pred_fallthru
          _
        %v334 = vld [vmem:[#allocation2] sm:$0xff]
        %v335 = vld [vmem:[#allocation2 + $0x8] sm:$0xff]
        %v336 = vld [vmem:[#allocation2 + $0x10] sm:$0xff]
        %v337 = vld [vmem:[#allocation2 + $0x18] sm:$0xff]
        %v338 = vld [vmem:[#allocation2 + $0x20] sm:$0xff]
        %v339 = vld [vmem:[#allocation2 + $0x28] sm:$0xff]
        %v340 = vld [vmem:[#allocation2 + $0x30] sm:$0xff]
        %v341 = vld [vmem:[#allocation2 + $0x38] sm:$0xff]
        %v342 = vld [vmem:[#allocation2 + $0x40] sm:$0xff]
        %v343 = vld [vmem:[#allocation2 + $0x48] sm:$0xff]
        %v344 = vld [vmem:[#allocation2 + $0x50] sm:$0xff]
        %v345 = vld [vmem:[#allocation2 + $0x58] sm:$0xff]
        %v346 = vld [vmem:[#allocation2 + $0x60] sm:$0xff]
        %v347 = vld [vmem:[#allocation2 + $0x68] sm:$0xff]
        %v348 = vld [vmem:[#allocation2 + $0x70] sm:$0xff]
        %v349 = vld [vmem:[#allocation2 + $0x78] sm:$0xff]
        %v350 = vld [vmem:[#allocation2 + $0x80] sm:$0xff]
        %v351 = vld [vmem:[#allocation2 + $0x88] sm:$0xff]
        %v352 = vld [vmem:[#allocation2 + $0x90] sm:$0xff]
        %v353 = vld [vmem:[#allocation2 + $0x98] sm:$0xff]
        %v354 = vld [vmem:[#allocation2 + $0xa0] sm:$0xff]
        %v355 = vld [vmem:[#allocation2 + $0xa8] sm:$0xff]
        %v356 = vld [vmem:[#allocation2 + $0xb0] sm:$0xff]
        %v357 = vld [vmem:[#allocation2 + $0xb8] sm:$0xff]
        %v358 = vld [vmem:[#allocation2 + $0xc0] sm:$0xff]
        %v359 = vld [vmem:[#allocation2 + $0xc8] sm:$0xff]
        %v360 = vld [vmem:[#allocation2 + $0xd0] sm:$0xff]
        %v361 = vld [vmem:[#allocation2 + $0xd8] sm:$0xff]
        %v362 = vld [vmem:[#allocation2 + $0xe0] sm:$0xff]
        %v363 = vld [vmem:[#allocation2 + $0xe8] sm:$0xff]
        %v364 = vld [vmem:[#allocation2 + $0xf0] sm:$0xff]
        %v365 = vld [vmem:[#allocation2 + $0xf8] sm:$0xff]
        %v366 = vld [vmem:[#allocation2 + $0x100] sm:$0xff]
        %v367 = vld [vmem:[#allocation2 + $0x108] sm:$0xff]
        %v368 = vld [vmem:[#allocation2 + $0x110] sm:$0xff]
        %v369 = vld [vmem:[#allocation2 + $0x118] sm:$0xff]
        %v370 = vld [vmem:[#allocation2 + $0x120] sm:$0xff]
        %v371 = vld [vmem:[#allocation2 + $0x128] sm:$0xff]
        %v372 = vld [vmem:[#allocation2 + $0x130] sm:$0xff]
        %v373 = vld [vmem:[#allocation2 + $0x138] sm:$0xff]
        %v374 = vld [vmem:[#allocation2 + $0x140] sm:$0xff]
        %v375 = vld [vmem:[#allocation2 + $0x148] sm:$0xff]
        %v376 = vld [vmem:[#allocation2 + $0x150] sm:$0xff]
        %v377 = vld [vmem:[#allocation2 + $0x158] sm:$0xff]
        %v378 = vld [vmem:[#allocation2 + $0x160] sm:$0xff]
        %v379 = vld [vmem:[#allocation2 + $0x168] sm:$0xff]
        %v380 = vld [vmem:[#allocation2 + $0x170] sm:$0xff]
        %v381 = vld [vmem:[#allocation2 + $0x178] sm:$0xff]
        %v382 = vld [vmem:[#allocation2 + $0x180] sm:$0xff]
        %v383 = vld [vmem:[#allocation2 + $0x188] sm:$0xff]
        %v384 = vld [vmem:[#allocation2 + $0x190] sm:$0xff]
        %v385 = vld [vmem:[#allocation2 + $0x198] sm:$0xff]
        %v386 = vld [vmem:[#allocation2 + $0x1a0] sm:$0xff]
        %v387 = vld [vmem:[#allocation2 + $0x1a8] sm:$0xff]
        %v388 = vld [vmem:[#allocation2 + $0x1b0] sm:$0xff]
        %v389 = vld [vmem:[#allocation2 + $0x1b8] sm:$0xff]
        %v390 = vld [vmem:[#allocation2 + $0x1c0] sm:$0xff]
        %v391 = vld [vmem:[#allocation2 + $0x1c8] sm:$0xff]
        %v392 = vld [vmem:[#allocation2 + $0x1d0] sm:$0xff]
        %v393 = vld [vmem:[#allocation2 + $0x1d8] sm:$0xff]
        %v394 = vld [vmem:[#allocation2 + $0x1e0] sm:$0xff]
        %v395 = vld [vmem:[#allocation2 + $0x1e8] sm:$0xff]
        %v396 = vld [vmem:[#allocation2 + $0x1f0] sm:$0xff]
        %v397 = vld [vmem:[#allocation2 + $0x1f8] sm:$0xff]
        %v398 = vld [vmem:[%s252] sm:$0xf]
        %v399 = vld [vmem:[%s252 + $0x4] sm:$0xf]
        %v400 = vld [vmem:[%s252 + $0x8] sm:$0xf]
        %v401 = vld [vmem:[%s252 + $0xc] sm:$0xf]
        %v402 = vld [vmem:[%s252 + $0x10] sm:$0xf]
        %v403 = vld [vmem:[%s252 + $0x14] sm:$0xf]
        %v404 = vld [vmem:[%s252 + $0x18] sm:$0xf]
        %v405 = vld [vmem:[%s252 + $0x1c] sm:$0xf]
        %v406 = vld [vmem:[%s252 + $0x20] sm:$0xf]
        %v407 = vld [vmem:[%s252 + $0x24] sm:$0xf]
        %v408 = vld [vmem:[%s252 + $0x28] sm:$0xf]
        %v409 = vld [vmem:[%s252 + $0x2c] sm:$0xf]
        %v410 = vld [vmem:[%s252 + $0x30] sm:$0xf]
        %v411 = vld [vmem:[%s252 + $0x34] sm:$0xf]
        %v412 = vld [vmem:[%s252 + $0x38] sm:$0xf]
        %v413 = vld [vmem:[%s252 + $0x3c] sm:$0xf]
        %v414 = vld [vmem:[%s252 + $0x40] sm:$0xf]
        %v415 = vld [vmem:[%s252 + $0x44] sm:$0xf]
        %v416 = vld [vmem:[%s252 + $0x48] sm:$0xf]
        %v417 = vld [vmem:[%s252 + $0x4c] sm:$0xf]
        %v418 = vld [vmem:[%s252 + $0x50] sm:$0xf]
        %v419 = vld [vmem:[%s252 + $0x54] sm:$0xf]
        %v420 = vld [vmem:[%s252 + $0x58] sm:$0xf]
        %v421 = vld [vmem:[%s252 + $0x5c] sm:$0xf]
        %v422 = vld [vmem:[%s252 + $0x60] sm:$0xf]
        %v423 = vld [vmem:[%s252 + $0x64] sm:$0xf]
        %v424 = vld [vmem:[%s252 + $0x68] sm:$0xf]
        %v425 = vld [vmem:[%s252 + $0x6c] sm:$0xf]
        %v426 = vld [vmem:[%s252 + $0x70] sm:$0xf]
        %v427 = vld [vmem:[%s252 + $0x74] sm:$0xf]
        %v428 = vld [vmem:[%s252 + $0x78] sm:$0xf]
        %v429 = vld [vmem:[%s252 + $0x7c] sm:$0xf]
        %v430 = vld [vmem:[%s252 + $0x80] sm:$0xf]
        %v431 = vld [vmem:[%s252 + $0x84] sm:$0xf]
        %v432 = vld [vmem:[%s252 + $0x88] sm:$0xf]
        %v433 = vld [vmem:[%s252 + $0x8c] sm:$0xf]
        %v434 = vld [vmem:[%s252 + $0x90] sm:$0xf]
        %v435 = vld [vmem:[%s252 + $0x94] sm:$0xf]
        %v436 = vld [vmem:[%s252 + $0x98] sm:$0xf]
        %v437 = vld [vmem:[%s252 + $0x9c] sm:$0xf]
        %v438 = vld [vmem:[%s252 + $0xa0] sm:$0xf]
        %v439 = vld [vmem:[%s252 + $0xa4] sm:$0xf]
        %v440 = vld [vmem:[%s252 + $0xa8] sm:$0xf]
        %v441 = vld [vmem:[%s252 + $0xac] sm:$0xf]
        %v442 = vld [vmem:[%s252 + $0xb0] sm:$0xf]
        %v443 = vld [vmem:[%s252 + $0xb4] sm:$0xf]
        %v444 = vld [vmem:[%s252 + $0xb8] sm:$0xf]
        %v445 = vld [vmem:[%s252 + $0xbc] sm:$0xf]
        %v446 = vld [vmem:[%s252 + $0xc0] sm:$0xf]
        %v447 = vld [vmem:[%s252 + $0xc4] sm:$0xf]
        %v448 = vld [vmem:[%s252 + $0xc8] sm:$0xf]
        %v449 = vld [vmem:[%s252 + $0xcc] sm:$0xf]
        %v450 = vld [vmem:[%s252 + $0xd0] sm:$0xf]
        %v451 = vld [vmem:[%s252 + $0xd4] sm:$0xf]
        %v452 = vld [vmem:[%s252 + $0xd8] sm:$0xf]
        %v453 = vld [vmem:[%s252 + $0xdc] sm:$0xf]
        %v454 = vld [vmem:[%s252 + $0xe0] sm:$0xf]
        %v455 = vld [vmem:[%s252 + $0xe4] sm:$0xf]
        %v456 = vld [vmem:[%s252 + $0xe8] sm:$0xf]
        %v457 = vld [vmem:[%s252 + $0xec] sm:$0xf]
        %v458 = vld [vmem:[%s252 + $0xf0] sm:$0xf]
        %v459 = vld [vmem:[%s252 + $0xf4] sm:$0xf]
        %v460 = vld [vmem:[%s252 + $0xf8] sm:$0xf]
        %v461 = vld [vmem:[%s252 + $0xfc] sm:$0xf]
        %v462 = vld [vmem:[%s262] sm:$0xf]
        %v463 = vld [vmem:[%s262 + $0x4] sm:$0xf]
        %v528 = vunpack.c.l.b16 %v398
        %v529 = vunpack.c.l.b16 %v399
        %v530 = vunpack.c.l.b16 %v400
        %v531 = vunpack.c.l.b16 %v401
        %v532 = vunpack.c.l.b16 %v402
        %v533 = vunpack.c.l.b16 %v403
        %v534 = vunpack.c.l.b16 %v404
        %v535 = vunpack.c.l.b16 %v405
        %v536 = vunpack.c.l.b16 %v406
        %v537 = vunpack.c.l.b16 %v407
        %v538 = vunpack.c.l.b16 %v408
        %v539 = vunpack.c.l.b16 %v409
        %v540 = vunpack.c.l.b16 %v410
        %v541 = vunpack.c.l.b16 %v411
        %v542 = vunpack.c.l.b16 %v412
        %v543 = vunpack.c.l.b16 %v413
        %v544 = vunpack.c.l.b16 %v414
        %v545 = vunpack.c.l.b16 %v415
        %v546 = vunpack.c.l.b16 %v416
        %v547 = vunpack.c.l.b16 %v417
        %v548 = vunpack.c.l.b16 %v418
        %v549 = vunpack.c.l.b16 %v419
        %v550 = vunpack.c.l.b16 %v420
        %v551 = vunpack.c.l.b16 %v421
        %v552 = vunpack.c.l.b16 %v422
        %v553 = vunpack.c.l.b16 %v423
        %v554 = vunpack.c.l.b16 %v424
        %v555 = vunpack.c.l.b16 %v425
        %v556 = vunpack.c.l.b16 %v426
        %v557 = vunpack.c.l.b16 %v427
        %v558 = vunpack.c.l.b16 %v428
        %v559 = vunpack.c.l.b16 %v429
        %v560 = vunpack.c.l.b16 %v430
        %v561 = vunpack.c.l.b16 %v431
        %v562 = vunpack.c.l.b16 %v432
        %v563 = vunpack.c.l.b16 %v433
        %v564 = vunpack.c.l.b16 %v434
        %v565 = vunpack.c.l.b16 %v435
        %v566 = vunpack.c.l.b16 %v436
        %v567 = vunpack.c.l.b16 %v437
        %v568 = vunpack.c.l.b16 %v438
        %v569 = vunpack.c.l.b16 %v439
        %v570 = vunpack.c.l.b16 %v440
        %v571 = vunpack.c.l.b16 %v441
        %v572 = vunpack.c.l.b16 %v442
        %v573 = vunpack.c.l.b16 %v443
        %v574 = vunpack.c.l.b16 %v444
        %v575 = vunpack.c.l.b16 %v445
        %v576 = vunpack.c.l.b16 %v446
        %v577 = vunpack.c.l.b16 %v447
        %v578 = vunpack.c.l.b16 %v448
        %v579 = vunpack.c.l.b16 %v449
        %v580 = vunpack.c.l.b16 %v450
        %v581 = vunpack.c.l.b16 %v451
        %v582 = vunpack.c.l.b16 %v452
        %v583 = vunpack.c.l.b16 %v453
        %v584 = vunpack.c.l.b16 %v454
        %v585 = vunpack.c.l.b16 %v455
        %v586 = vunpack.c.l.b16 %v456
        %v587 = vunpack.c.l.b16 %v457
        %v588 = vunpack.c.l.b16 %v458
        %v589 = vunpack.c.l.b16 %v459
        %v590 = vunpack.c.l.b16 %v460
        %v591 = vunpack.c.l.b16 %v461
        %v592 = vpack.c.b16 %v529, %v528
        %v593 = vpack.c.b16 %v531, %v530
        %v594 = vpack.c.b16 %v533, %v532
        %v595 = vpack.c.b16 %v535, %v534
        %v596 = vpack.c.b16 %v537, %v536
        %v597 = vpack.c.b16 %v539, %v538
        %v598 = vpack.c.b16 %v541, %v540
        %v599 = vpack.c.b16 %v543, %v542
        %v600 = vpack.c.b16 %v545, %v544
        %v601 = vpack.c.b16 %v547, %v546
        %v602 = vpack.c.b16 %v549, %v548
        %v603 = vpack.c.b16 %v551, %v550
        %v604 = vpack.c.b16 %v553, %v552
        %v605 = vpack.c.b16 %v555, %v554
        %v606 = vpack.c.b16 %v557, %v556
        %v607 = vpack.c.b16 %v559, %v558
        %v608 = vpack.c.b16 %v561, %v560
        %v609 = vpack.c.b16 %v563, %v562
        %v610 = vpack.c.b16 %v565, %v564
        %v611 = vpack.c.b16 %v567, %v566
        %v612 = vpack.c.b16 %v569, %v568
        %v613 = vpack.c.b16 %v571, %v570
        %v614 = vpack.c.b16 %v573, %v572
        %v615 = vpack.c.b16 %v575, %v574
        %v616 = vpack.c.b16 %v577, %v576
        %v617 = vpack.c.b16 %v579, %v578
        %v618 = vpack.c.b16 %v581, %v580
        %v619 = vpack.c.b16 %v583, %v582
        %v620 = vpack.c.b16 %v585, %v584
        %v621 = vpack.c.b16 %v587, %v586
        %v622 = vpack.c.b16 %v589, %v588
        %v623 = vpack.c.b16 %v591, %v590
        %v626 = vunpack.c.l.b16 %v462
        %v627 = vunpack.c.l.b16 %v463
        %v628 = vpack.c.b16 %v627, %v626
        %vm630 = vcmask 130048
        %v632 = vsel %vm630, %v592, 0
        %v635 = vsel %vm630, %v593, 0
        %v638 = vsel %vm630, %v594, 0
        %v641 = vsel %vm630, %v595, 0
        %v644 = vsel %vm630, %v596, 0
        %v647 = vsel %vm630, %v597, 0
        %v650 = vsel %vm630, %v598, 0
        %v653 = vsel %vm630, %v599, 0
        %v656 = vsel %vm630, %v600, 0
        %v659 = vsel %vm630, %v601, 0
        %v662 = vsel %vm630, %v602, 0
        %v665 = vsel %vm630, %v603, 0
        %v668 = vsel %vm630, %v604, 0
        %v671 = vsel %vm630, %v605, 0
        %v674 = vsel %vm630, %v606, 0
        %v677 = vsel %vm630, %v607, 0
        %v680 = vsel %vm630, %v608, 0
        %v683 = vsel %vm630, %v609, 0
        %v686 = vsel %vm630, %v610, 0
        %v689 = vsel %vm630, %v611, 0
        %v692 = vsel %vm630, %v612, 0
        %v695 = vsel %vm630, %v613, 0
        %v698 = vsel %vm630, %v614, 0
        %v701 = vsel %vm630, %v615, 0
        %v704 = vsel %vm630, %v616, 0
        %v707 = vsel %vm630, %v617, 0
        %v710 = vsel %vm630, %v618, 0
        %v713 = vsel %vm630, %v619, 0
        %v716 = vsel %vm630, %v620, 0
        %v719 = vsel %vm630, %v621, 0
        %v722 = vsel %vm630, %v622, 0
        %v725 = vsel %vm630, %v623, 0
        %727 = vmatprep.subr.bf16.mxu0 0
        %728 = vmatpush1.bf16.msra.mxu0 %v628
        %729 = vmatprep.subr.bf16.mxu0 0
        %730 = vmatpush1.bf16.msra.mxu0 0
        %731 = vmatprep.subr.bf16.mxu0 0
        %732 = vmatpush1.bf16.msra.mxu0 0
        %733 = vmatprep.subr.bf16.mxu0 0
        %734 = vmatpush1.bf16.msra.mxu0 0
        %735 = vmatprep.subr.bf16.mxu0 0
        %736 = vmatpush1.bf16.msra.mxu0 0
        %737 = vmatprep.subr.bf16.mxu0 0
        %738 = vmatpush1.bf16.msra.mxu0 0
        %739 = vmatprep.subr.bf16.mxu0 0
        %740 = vmatpush1.bf16.msra.mxu0 0
        %741 = vmatprep.subr.bf16.mxu0 0
        %742 = vmatpush1.bf16.msra.mxu0 0
        %743 = vmatprep.subr.bf16.mxu0 0
        %744 = vmatpush1.bf16.msra.mxu0 0
        %745 = vmatprep.subr.bf16.mxu0 0
        %746 = vmatpush1.bf16.msra.mxu0 0
        %747 = vmatprep.subr.bf16.mxu0 0
        %748 = vmatpush1.bf16.msra.mxu0 0
        %749 = vmatprep.subr.bf16.mxu0 0
        %750 = vmatpush1.bf16.msra.mxu0 0
        %751 = vmatprep.subr.bf16.mxu0 0
        %752 = vmatpush1.bf16.msra.mxu0 0
        %753 = vmatprep.subr.bf16.mxu0 0
        %754 = vmatpush1.bf16.msra.mxu0 0
        %755 = vmatprep.subr.bf16.mxu0 0
        %756 = vmatpush1.bf16.msra.mxu0 0
        %757 = vmatprep.subr.bf16.mxu0 0
        %758 = vmatpush1.bf16.msra.mxu0 0
        %759 = vmatprep.mubr.bf16.mxu0 0
        %760 = vmatmul.mubr.bf16.gmra.mrb[0].mxu0 %v632
        %v761 = vpop.f32.mrb[0].mxu0
        %v762 = vadd.f32 0.0, %v761
        %v763 = vpop.f32.mrb[0].mxu0
        %v764 = vpop.f32.mrb[0].mxu0
        %v765 = vadd.f32 0.0, %v764
        %v766 = vpop.f32.mrb[0].mxu0
        %767 = vmatprep.mubr.bf16.mxu0 0
        %768 = vmatmul.mubr.bf16.gmra.mrb[0].mxu0 %v635
        %v769 = vpop.f32.mrb[0].mxu0
        %v770 = vadd.f32 0.0, %v769
        %v771 = vpop.f32.mrb[0].mxu0
        %v772 = vpop.f32.mrb[0].mxu0
        %v773 = vadd.f32 0.0, %v772
        %v774 = vpop.f32.mrb[0].mxu0
        %775 = vmatprep.mubr.bf16.mxu0 0
        %776 = vmatmul.mubr.bf16.gmra.mrb[0].mxu0 %v638
        %v777 = vpop.f32.mrb[0].mxu0
        %v778 = vadd.f32 0.0, %v777
        %v779 = vpop.f32.mrb[0].mxu0
        %v780 = vpop.f32.mrb[0].mxu0
        %v781 = vadd.f32 0.0, %v780
        %v782 = vpop.f32.mrb[0].mxu0
        %783 = vmatprep.mubr.bf16.mxu0 0
        %784 = vmatmul.mubr.bf16.gmra.mrb[0].mxu0 %v641
        %v785 = vpop.f32.mrb[0].mxu0
        %v786 = vadd.f32 0.0, %v785
        %v787 = vpop.f32.mrb[0].mxu0
        %v788 = vpop.f32.mrb[0].mxu0
        %v789 = vadd.f32 0.0, %v788
        %v790 = vpop.f32.mrb[0].mxu0
        %791 = vmatprep.mubr.bf16.mxu0 0
        %792 = vmatmul.mubr.bf16.gmra.mrb[0].mxu0 %v644
        %v793 = vpop.f32.mrb[0].mxu0
        %v794 = vadd.f32 0.0, %v793
        %v795 = vpop.f32.mrb[0].mxu0
        %v796 = vpop.f32.mrb[0].mxu0
        %v797 = vadd.f32 0.0, %v796
        %v798 = vpop.f32.mrb[0].mxu0
        %799 = vmatprep.mubr.bf16.mxu0 0
        %800 = vmatmul.mubr.bf16.gmra.mrb[0].mxu0 %v647
        %v801 = vpop.f32.mrb[0].mxu0
        %v802 = vadd.f32 0.0, %v801
        %v803 = vpop.f32.mrb[0].mxu0
        %v804 = vpop.f32.mrb[0].mxu0
        %v805 = vadd.f32 0.0, %v804
        %v806 = vpop.f32.mrb[0].mxu0
        %807 = vmatprep.mubr.bf16.mxu0 0
        %808 = vmatmul.mubr.bf16.gmra.mrb[0].mxu0 %v650
        %v809 = vpop.f32.mrb[0].mxu0
        %v810 = vadd.f32 0.0, %v809
        %v811 = vpop.f32.mrb[0].mxu0
        %v812 = vpop.f32.mrb[0].mxu0
        %v813 = vadd.f32 0.0, %v812
        %v814 = vpop.f32.mrb[0].mxu0
        %815 = vmatprep.mubr.bf16.mxu0 0
        %816 = vmatmul.mubr.bf16.gmra.mrb[0].mxu0 %v653
        %v817 = vpop.f32.mrb[0].mxu0
        %v818 = vadd.f32 0.0, %v817
        %v819 = vpop.f32.mrb[0].mxu0
        %v820 = vpop.f32.mrb[0].mxu0
        %v821 = vadd.f32 0.0, %v820
        %v822 = vpop.f32.mrb[0].mxu0
        %823 = vmatprep.mubr.bf16.mxu0 0
        %824 = vmatmul.mubr.bf16.gmra.mrb[0].mxu0 %v656
        %v825 = vpop.f32.mrb[0].mxu0
        %v826 = vadd.f32 0.0, %v825
        %v827 = vpop.f32.mrb[0].mxu0
        %v828 = vpop.f32.mrb[0].mxu0
        %v829 = vadd.f32 0.0, %v828
        %v830 = vpop.f32.mrb[0].mxu0
        %831 = vmatprep.mubr.bf16.mxu0 0
        %832 = vmatmul.mubr.bf16.gmra.mrb[0].mxu0 %v659
        %v833 = vpop.f32.mrb[0].mxu0
        %v834 = vadd.f32 0.0, %v833
        %v835 = vpop.f32.mrb[0].mxu0
        %v836 = vpop.f32.mrb[0].mxu0
        %v837 = vadd.f32 0.0, %v836
        %v838 = vpop.f32.mrb[0].mxu0
        %839 = vmatprep.mubr.bf16.mxu0 0
        %840 = vmatmul.mubr.bf16.gmra.mrb[0].mxu0 %v662
        %v841 = vpop.f32.mrb[0].mxu0
        %v842 = vadd.f32 0.0, %v841
        %v843 = vpop.f32.mrb[0].mxu0
        %v844 = vpop.f32.mrb[0].mxu0
        %v845 = vadd.f32 0.0, %v844
        %v846 = vpop.f32.mrb[0].mxu0
        %847 = vmatprep.mubr.bf16.mxu0 0
        %848 = vmatmul.mubr.bf16.gmra.mrb[0].mxu0 %v665
        %v849 = vpop.f32.mrb[0].mxu0
        %v850 = vadd.f32 0.0, %v849
        %v851 = vpop.f32.mrb[0].mxu0
        %v852 = vpop.f32.mrb[0].mxu0
        %v853 = vadd.f32 0.0, %v852
        %v854 = vpop.f32.mrb[0].mxu0
        %855 = vmatprep.mubr.bf16.mxu0 0
        %856 = vmatmul.mubr.bf16.gmra.mrb[0].mxu0 %v668
        %v857 = vpop.f32.mrb[0].mxu0
        %v858 = vadd.f32 0.0, %v857
        %v859 = vpop.f32.mrb[0].mxu0
        %v860 = vpop.f32.mrb[0].mxu0
        %v861 = vadd.f32 0.0, %v860
        %v862 = vpop.f32.mrb[0].mxu0
        %863 = vmatprep.mubr.bf16.mxu0 0
        %864 = vmatmul.mubr.bf16.gmra.mrb[0].mxu0 %v671
        %v865 = vpop.f32.mrb[0].mxu0
        %v866 = vadd.f32 0.0, %v865
        %v867 = vpop.f32.mrb[0].mxu0
        %v868 = vpop.f32.mrb[0].mxu0
        %v869 = vadd.f32 0.0, %v868
        %v870 = vpop.f32.mrb[0].mxu0
        %871 = vmatprep.mubr.bf16.mxu0 0
        %872 = vmatmul.mubr.bf16.gmra.mrb[0].mxu0 %v674
        %v873 = vpop.f32.mrb[0].mxu0
        %v874 = vadd.f32 0.0, %v873
        %v875 = vpop.f32.mrb[0].mxu0
        %v876 = vpop.f32.mrb[0].mxu0
        %v877 = vadd.f32 0.0, %v876
        %v878 = vpop.f32.mrb[0].mxu0
        %879 = vmatprep.mubr.bf16.mxu0 0
        %880 = vmatmul.mubr.bf16.gmra.mrb[0].mxu0 %v677
        %v881 = vpop.f32.mrb[0].mxu0
        %v882 = vadd.f32 0.0, %v881
        %v883 = vpop.f32.mrb[0].mxu0
        %v884 = vpop.f32.mrb[0].mxu0
        %v885 = vadd.f32 0.0, %v884
        %v886 = vpop.f32.mrb[0].mxu0
        %887 = vmatprep.mubr.bf16.mxu0 0
        %888 = vmatmul.mubr.bf16.gmra.mrb[0].mxu0 %v680
        %v889 = vpop.f32.mrb[0].mxu0
        %v890 = vadd.f32 0.0, %v889
        %v891 = vpop.f32.mrb[0].mxu0
        %v892 = vpop.f32.mrb[0].mxu0
        %v893 = vadd.f32 0.0, %v892
        %v894 = vpop.f32.mrb[0].mxu0
        %895 = vmatprep.mubr.bf16.mxu0 0
        %896 = vmatmul.mubr.bf16.gmra.mrb[0].mxu0 %v683
        %v897 = vpop.f32.mrb[0].mxu0
        %v898 = vadd.f32 0.0, %v897
        %v899 = vpop.f32.mrb[0].mxu0
        %v900 = vpop.f32.mrb[0].mxu0
        %v901 = vadd.f32 0.0, %v900
        %v902 = vpop.f32.mrb[0].mxu0
        %903 = vmatprep.mubr.bf16.mxu0 0
        %904 = vmatmul.mubr.bf16.gmra.mrb[0].mxu0 %v686
        %v905 = vpop.f32.mrb[0].mxu0
        %v906 = vadd.f32 0.0, %v905
        %v907 = vpop.f32.mrb[0].mxu0
        %v908 = vpop.f32.mrb[0].mxu0
        %v909 = vadd.f32 0.0, %v908
        %v910 = vpop.f32.mrb[0].mxu0
        %911 = vmatprep.mubr.bf16.mxu0 0
        %912 = vmatmul.mubr.bf16.gmra.mrb[0].mxu0 %v689
        %v913 = vpop.f32.mrb[0].mxu0
        %v914 = vadd.f32 0.0, %v913
        %v915 = vpop.f32.mrb[0].mxu0
        %v916 = vpop.f32.mrb[0].mxu0
        %v917 = vadd.f32 0.0, %v916
        %v918 = vpop.f32.mrb[0].mxu0
        %919 = vmatprep.mubr.bf16.mxu0 0
        %920 = vmatmul.mubr.bf16.gmra.mrb[0].mxu0 %v692
        %v921 = vpop.f32.mrb[0].mxu0
        %v922 = vadd.f32 0.0, %v921
        %v923 = vpop.f32.mrb[0].mxu0
        %v924 = vpop.f32.mrb[0].mxu0
        %v925 = vadd.f32 0.0, %v924
        %v926 = vpop.f32.mrb[0].mxu0
        %927 = vmatprep.mubr.bf16.mxu0 0
        %928 = vmatmul.mubr.bf16.gmra.mrb[0].mxu0 %v695
        %v929 = vpop.f32.mrb[0].mxu0
        %v930 = vadd.f32 0.0, %v929
        %v931 = vpop.f32.mrb[0].mxu0
        %v932 = vpop.f32.mrb[0].mxu0
        %v933 = vadd.f32 0.0, %v932
        %v934 = vpop.f32.mrb[0].mxu0
        %935 = vmatprep.mubr.bf16.mxu0 0
        %936 = vmatmul.mubr.bf16.gmra.mrb[0].mxu0 %v698
        %v937 = vpop.f32.mrb[0].mxu0
        %v938 = vadd.f32 0.0, %v937
        %v939 = vpop.f32.mrb[0].mxu0
        %v940 = vpop.f32.mrb[0].mxu0
        %v941 = vadd.f32 0.0, %v940
        %v942 = vpop.f32.mrb[0].mxu0
        %943 = vmatprep.mubr.bf16.mxu0 0
        %944 = vmatmul.mubr.bf16.gmra.mrb[0].mxu0 %v701
        %v945 = vpop.f32.mrb[0].mxu0
        %v946 = vadd.f32 0.0, %v945
        %v947 = vpop.f32.mrb[0].mxu0
        %v948 = vpop.f32.mrb[0].mxu0
        %v949 = vadd.f32 0.0, %v948
        %v950 = vpop.f32.mrb[0].mxu0
        %951 = vmatprep.mubr.bf16.mxu0 0
        %952 = vmatmul.mubr.bf16.gmra.mrb[0].mxu0 %v704
        %v953 = vpop.f32.mrb[0].mxu0
        %v954 = vadd.f32 0.0, %v953
        %v955 = vpop.f32.mrb[0].mxu0
        %v956 = vpop.f32.mrb[0].mxu0
        %v957 = vadd.f32 0.0, %v956
        %v958 = vpop.f32.mrb[0].mxu0
        %959 = vmatprep.mubr.bf16.mxu0 0
        %960 = vmatmul.mubr.bf16.gmra.mrb[0].mxu0 %v707
        %v961 = vpop.f32.mrb[0].mxu0
        %v962 = vadd.f32 0.0, %v961
        %v963 = vpop.f32.mrb[0].mxu0
        %v964 = vpop.f32.mrb[0].mxu0
        %v965 = vadd.f32 0.0, %v964
        %v966 = vpop.f32.mrb[0].mxu0
        %967 = vmatprep.mubr.bf16.mxu0 0
        %968 = vmatmul.mubr.bf16.gmra.mrb[0].mxu0 %v710
        %v969 = vpop.f32.mrb[0].mxu0
        %v970 = vadd.f32 0.0, %v969
        %v971 = vpop.f32.mrb[0].mxu0
        %v972 = vpop.f32.mrb[0].mxu0
        %v973 = vadd.f32 0.0, %v972
        %v974 = vpop.f32.mrb[0].mxu0
        %975 = vmatprep.mubr.bf16.mxu0 0
        %976 = vmatmul.mubr.bf16.gmra.mrb[0].mxu0 %v713
        %v977 = vpop.f32.mrb[0].mxu0
        %v978 = vadd.f32 0.0, %v977
        %v979 = vpop.f32.mrb[0].mxu0
        %v980 = vpop.f32.mrb[0].mxu0
        %v981 = vadd.f32 0.0, %v980
        %v982 = vpop.f32.mrb[0].mxu0
        %983 = vmatprep.mubr.bf16.mxu0 0
        %984 = vmatmul.mubr.bf16.gmra.mrb[0].mxu0 %v716
        %v985 = vpop.f32.mrb[0].mxu0
        %v986 = vadd.f32 0.0, %v985
        %v987 = vpop.f32.mrb[0].mxu0
        %v988 = vpop.f32.mrb[0].mxu0
        %v989 = vadd.f32 0.0, %v988
        %v990 = vpop.f32.mrb[0].mxu0
        %991 = vmatprep.mubr.bf16.mxu0 0
        %992 = vmatmul.mubr.bf16.gmra.mrb[0].mxu0 %v719
        %v993 = vpop.f32.mrb[0].mxu0
        %v994 = vadd.f32 0.0, %v993
        %v995 = vpop.f32.mrb[0].mxu0
        %v996 = vpop.f32.mrb[0].mxu0
        %v997 = vadd.f32 0.0, %v996
        %v998 = vpop.f32.mrb[0].mxu0
        %999 = vmatprep.mubr.bf16.mxu0 0
        %1000 = vmatmul.mubr.bf16.gmra.mrb[0].mxu0 %v722
        %v1001 = vpop.f32.mrb[0].mxu0
        %v1002 = vadd.f32 0.0, %v1001
        %v1003 = vpop.f32.mrb[0].mxu0
        %v1004 = vpop.f32.mrb[0].mxu0
        %v1005 = vadd.f32 0.0, %v1004
        %v1006 = vpop.f32.mrb[0].mxu0
        %1007 = vmatprep.mubr.bf16.mxu0 0
        %1008 = vmatmul.mubr.bf16.gmra.mrb[0].mxu0 %v725
        %v1009 = vpop.f32.mrb[0].mxu0
        %v1010 = vadd.f32 0.0, %v1009
        %v1011 = vpop.f32.mrb[0].mxu0
        %v1012 = vpop.f32.mrb[0].mxu0
        %v1013 = vadd.f32 0.0, %v1012
        %v1014 = vpop.f32.mrb[0].mxu0
        %1015 = vdwg.mxu0
        %v1016 = vadd.f32 %v334, %v762
        %v1017 = vadd.f32 %v335, %v765
        %v1018 = vadd.f32 %v336, %v770
        %v1019 = vadd.f32 %v337, %v773
        %v1020 = vadd.f32 %v338, %v778
        %v1021 = vadd.f32 %v339, %v781
        %v1022 = vadd.f32 %v340, %v786
        %v1023 = vadd.f32 %v341, %v789
        %v1024 = vadd.f32 %v342, %v794
        %v1025 = vadd.f32 %v343, %v797
        %v1026 = vadd.f32 %v344, %v802
        %v1027 = vadd.f32 %v345, %v805
        %v1028 = vadd.f32 %v346, %v810
        %v1029 = vadd.f32 %v347, %v813
        %v1030 = vadd.f32 %v348, %v818
        %v1031 = vadd.f32 %v349, %v821
        %v1032 = vadd.f32 %v350, %v826
        %v1033 = vadd.f32 %v351, %v829
        %v1034 = vadd.f32 %v352, %v834
        %v1035 = vadd.f32 %v353, %v837
        %v1036 = vadd.f32 %v354, %v842
        %v1037 = vadd.f32 %v355, %v845
        %v1038 = vadd.f32 %v356, %v850
        %v1039 = vadd.f32 %v357, %v853
        %v1040 = vadd.f32 %v358, %v858
        %v1041 = vadd.f32 %v359, %v861
        %v1042 = vadd.f32 %v360, %v866
        %v1043 = vadd.f32 %v361, %v869
        %v1044 = vadd.f32 %v362, %v874
        %v1045 = vadd.f32 %v363, %v877
        %v1046 = vadd.f32 %v364, %v882
        %v1047 = vadd.f32 %v365, %v885
        %v1048 = vadd.f32 %v366, %v890
        %v1049 = vadd.f32 %v367, %v893
        %v1050 = vadd.f32 %v368, %v898
        %v1051 = vadd.f32 %v369, %v901
        %v1052 = vadd.f32 %v370, %v906
        %v1053 = vadd.f32 %v371, %v909
        %v1054 = vadd.f32 %v372, %v914
        %v1055 = vadd.f32 %v373, %v917
        %v1056 = vadd.f32 %v374, %v922
        %v1057 = vadd.f32 %v375, %v925
        %v1058 = vadd.f32 %v376, %v930
        %v1059 = vadd.f32 %v377, %v933
        %v1060 = vadd.f32 %v378, %v938
        %v1061 = vadd.f32 %v379, %v941
        %v1062 = vadd.f32 %v380, %v946
        %v1063 = vadd.f32 %v381, %v949
        %v1064 = vadd.f32 %v382, %v954
        %v1065 = vadd.f32 %v383, %v957
        %v1066 = vadd.f32 %v384, %v962
        %v1067 = vadd.f32 %v385, %v965
        %v1068 = vadd.f32 %v386, %v970
        %v1069 = vadd.f32 %v387, %v973
        %v1070 = vadd.f32 %v388, %v978
        %v1071 = vadd.f32 %v389, %v981
        %v1072 = vadd.f32 %v390, %v986
        %v1073 = vadd.f32 %v391, %v989
        %v1074 = vadd.f32 %v392, %v994
        %v1075 = vadd.f32 %v393, %v997
        %v1076 = vadd.f32 %v394, %v1002
        %v1077 = vadd.f32 %v395, %v1005
        %v1078 = vadd.f32 %v396, %v1010
        %v1079 = vadd.f32 %v397, %v1013
        %1080 = vst [vmem:[#allocation2] sm:$0xff] %v1016
        %1081 = vst [vmem:[#allocation2 + $0x8] sm:$0xff] %v1017
        %1082 = vst [vmem:[#allocation2 + $0x10] sm:$0xff] %v1018
        %1083 = vst [vmem:[#allocation2 + $0x18] sm:$0xff] %v1019
        %1084 = vst [vmem:[#allocation2 + $0x20] sm:$0xff] %v1020
        %1085 = vst [vmem:[#allocation2 + $0x28] sm:$0xff] %v1021
        %1086 = vst [vmem:[#allocation2 + $0x30] sm:$0xff] %v1022
        %1087 = vst [vmem:[#allocation2 + $0x38] sm:$0xff] %v1023
        %1088 = vst [vmem:[#allocation2 + $0x40] sm:$0xff] %v1024
        %1089 = vst [vmem:[#allocation2 + $0x48] sm:$0xff] %v1025
        %1090 = vst [vmem:[#allocation2 + $0x50] sm:$0xff] %v1026
        %1091 = vst [vmem:[#allocation2 + $0x58] sm:$0xff] %v1027
        %1092 = vst [vmem:[#allocation2 + $0x60] sm:$0xff] %v1028
        %1093 = vst [vmem:[#allocation2 + $0x68] sm:$0xff] %v1029
        %1094 = vst [vmem:[#allocation2 + $0x70] sm:$0xff] %v1030
        %1095 = vst [vmem:[#allocation2 + $0x78] sm:$0xff] %v1031
        %1096 = vst [vmem:[#allocation2 + $0x80] sm:$0xff] %v1032
        %1097 = vst [vmem:[#allocation2 + $0x88] sm:$0xff] %v1033
        %1098 = vst [vmem:[#allocation2 + $0x90] sm:$0xff] %v1034
        %1099 = vst [vmem:[#allocation2 + $0x98] sm:$0xff] %v1035
        %1100 = vst [vmem:[#allocation2 + $0xa0] sm:$0xff] %v1036
        %1101 = vst [vmem:[#allocation2 + $0xa8] sm:$0xff] %v1037
        %1102 = vst [vmem:[#allocation2 + $0xb0] sm:$0xff] %v1038
        %1103 = vst [vmem:[#allocation2 + $0xb8] sm:$0xff] %v1039
        %1104 = vst [vmem:[#allocation2 + $0xc0] sm:$0xff] %v1040
        %1105 = vst [vmem:[#allocation2 + $0xc8] sm:$0xff] %v1041
        %1106 = vst [vmem:[#allocation2 + $0xd0] sm:$0xff] %v1042
        %1107 = vst [vmem:[#allocation2 + $0xd8] sm:$0xff] %v1043
        %1108 = vst [vmem:[#allocation2 + $0xe0] sm:$0xff] %v1044
        %1109 = vst [vmem:[#allocation2 + $0xe8] sm:$0xff] %v1045
        %1110 = vst [vmem:[#allocation2 + $0xf0] sm:$0xff] %v1046
        %1111 = vst [vmem:[#allocation2 + $0xf8] sm:$0xff] %v1047
        %1112 = vst [vmem:[#allocation2 + $0x100] sm:$0xff] %v1048
        %1113 = vst [vmem:[#allocation2 + $0x108] sm:$0xff] %v1049
        %1114 = vst [vmem:[#allocation2 + $0x110] sm:$0xff] %v1050
        %1115 = vst [vmem:[#allocation2 + $0x118] sm:$0xff] %v1051
        %1116 = vst [vmem:[#allocation2 + $0x120] sm:$0xff] %v1052
        %1117 = vst [vmem:[#allocation2 + $0x128] sm:$0xff] %v1053
        %1118 = vst [vmem:[#allocation2 + $0x130] sm:$0xff] %v1054
        %1119 = vst [vmem:[#allocation2 + $0x138] sm:$0xff] %v1055
        %1120 = vst [vmem:[#allocation2 + $0x140] sm:$0xff] %v1056
        %1121 = vst [vmem:[#allocation2 + $0x148] sm:$0xff] %v1057
        %1122 = vst [vmem:[#allocation2 + $0x150] sm:$0xff] %v1058
        %1123 = vst [vmem:[#allocation2 + $0x158] sm:$0xff] %v1059
        %1124 = vst [vmem:[#allocation2 + $0x160] sm:$0xff] %v1060
        %1125 = vst [vmem:[#allocation2 + $0x168] sm:$0xff] %v1061
        %1126 = vst [vmem:[#allocation2 + $0x170] sm:$0xff] %v1062
        %1127 = vst [vmem:[#allocation2 + $0x178] sm:$0xff] %v1063
        %1128 = vst [vmem:[#allocation2 + $0x180] sm:$0xff] %v1064
        %1129 = vst [vmem:[#allocation2 + $0x188] sm:$0xff] %v1065
        %1130 = vst [vmem:[#allocation2 + $0x190] sm:$0xff] %v1066
        %1131 = vst [vmem:[#allocation2 + $0x198] sm:$0xff] %v1067
        %1132 = vst [vmem:[#allocation2 + $0x1a0] sm:$0xff] %v1068
        %1133 = vst [vmem:[#allocation2 + $0x1a8] sm:$0xff] %v1069
        %1134 = vst [vmem:[#allocation2 + $0x1b0] sm:$0xff] %v1070
        %1135 = vst [vmem:[#allocation2 + $0x1b8] sm:$0xff] %v1071
        %1136 = vst [vmem:[#allocation2 + $0x1c0] sm:$0xff] %v1072
        %1137 = vst [vmem:[#allocation2 + $0x1c8] sm:$0xff] %v1073
        %1138 = vst [vmem:[#allocation2 + $0x1d0] sm:$0xff] %v1074
        %1139 = vst [vmem:[#allocation2 + $0x1d8] sm:$0xff] %v1075
        %1140 = vst [vmem:[#allocation2 + $0x1e0] sm:$0xff] %v1076
        %1141 = vst [vmem:[#allocation2 + $0x1e8] sm:$0xff] %v1077
        %1142 = vst [vmem:[#allocation2 + $0x1f0] sm:$0xff] %v1078
        %1143 = vst [vmem:[#allocation2 + $0x1f8] sm:$0xff] %v1079
        %p1144 = scmp.eq.s32.totalorder %s27, 0
        %p1145 = pnand %p1144, %p266
        %p1146 = pneg %p1145
        // Predicated region
        $region33: #{tpu_custom_call.1} parent=27 // pred_check
          _
        $region34: #{tpu_custom_call.1} parent=27 // pred_check_branch
          %1148 = sbr.rel (%p1145) target = $region36
        $region35: #{tpu_custom_call.1} parent=27 // pred_region
          %1149 = vst [vmem:[%s240] sm:$0xff] 0.0
        $region36: #{tpu_custom_call.1} parent=27 // pred_fallthru
          _
        // Predicated region
        $region37: #{tpu_custom_call.1} parent=27 // pred_check
          %p1150 = pneg %p266
        $region38: #{tpu_custom_call.1} parent=27 // pred_check_branch
          %1152 = sbr.rel (%p1150) target = $region40
        $region39: #{tpu_custom_call.1} parent=27 // pred_region
          %v1153 = vld [vmem:[#allocation2] sm:$0xff]
          %v1154 = vld [vmem:[#allocation2 + $0x8] sm:$0xff]
          %v1155 = vld [vmem:[#allocation2 + $0x10] sm:$0xff]
          %v1156 = vld [vmem:[#allocation2 + $0x18] sm:$0xff]
          %v1157 = vld [vmem:[#allocation2 + $0x20] sm:$0xff]
          %v1158 = vld [vmem:[#allocation2 + $0x28] sm:$0xff]
          %v1159 = vld [vmem:[#allocation2 + $0x30] sm:$0xff]
          %v1160 = vld [vmem:[#allocation2 + $0x38] sm:$0xff]
          %v1161 = vld [vmem:[#allocation2 + $0x40] sm:$0xff]
          %v1162 = vld [vmem:[#allocation2 + $0x48] sm:$0xff]
          %v1163 = vld [vmem:[#allocation2 + $0x50] sm:$0xff]
          %v1164 = vld [vmem:[#allocation2 + $0x58] sm:$0xff]
          %v1165 = vld [vmem:[#allocation2 + $0x60] sm:$0xff]
          %v1166 = vld [vmem:[#allocation2 + $0x68] sm:$0xff]
          %v1167 = vld [vmem:[#allocation2 + $0x70] sm:$0xff]
          %v1168 = vld [vmem:[#allocation2 + $0x78] sm:$0xff]
          %v1169 = vld [vmem:[#allocation2 + $0x80] sm:$0xff]
          %v1170 = vld [vmem:[#allocation2 + $0x88] sm:$0xff]
          %v1171 = vld [vmem:[#allocation2 + $0x90] sm:$0xff]
          %v1172 = vld [vmem:[#allocation2 + $0x98] sm:$0xff]
          %v1173 = vld [vmem:[#allocation2 + $0xa0] sm:$0xff]
          %v1174 = vld [vmem:[#allocation2 + $0xa8] sm:$0xff]
          %v1175 = vld [vmem:[#allocation2 + $0xb0] sm:$0xff]
          %v1176 = vld [vmem:[#allocation2 + $0xb8] sm:$0xff]
          %v1177 = vld [vmem:[#allocation2 + $0xc0] sm:$0xff]
          %v1178 = vld [vmem:[#allocation2 + $0xc8] sm:$0xff]
          %v1179 = vld [vmem:[#allocation2 + $0xd0] sm:$0xff]
          %v1180 = vld [vmem:[#allocation2 + $0xd8] sm:$0xff]
          %v1181 = vld [vmem:[#allocation2 + $0xe0] sm:$0xff]
          %v1182 = vld [vmem:[#allocation2 + $0xe8] sm:$0xff]
          %v1183 = vld [vmem:[#allocation2 + $0xf0] sm:$0xff]
          %v1184 = vld [vmem:[#allocation2 + $0xf8] sm:$0xff]
          %v1185 = vld [vmem:[#allocation2 + $0x100] sm:$0xff]
          %v1186 = vld [vmem:[#allocation2 + $0x108] sm:$0xff]
          %v1187 = vld [vmem:[#allocation2 + $0x110] sm:$0xff]
          %v1188 = vld [vmem:[#allocation2 + $0x118] sm:$0xff]
          %v1189 = vld [vmem:[#allocation2 + $0x120] sm:$0xff]
          %v1190 = vld [vmem:[#allocation2 + $0x128] sm:$0xff]
          %v1191 = vld [vmem:[#allocation2 + $0x130] sm:$0xff]
          %v1192 = vld [vmem:[#allocation2 + $0x138] sm:$0xff]
          %v1193 = vld [vmem:[#allocation2 + $0x140] sm:$0xff]
          %v1194 = vld [vmem:[#allocation2 + $0x148] sm:$0xff]
          %v1195 = vld [vmem:[#allocation2 + $0x150] sm:$0xff]
          %v1196 = vld [vmem:[#allocation2 + $0x158] sm:$0xff]
          %v1197 = vld [vmem:[#allocation2 + $0x160] sm:$0xff]
          %v1198 = vld [vmem:[#allocation2 + $0x168] sm:$0xff]
          %v1199 = vld [vmem:[#allocation2 + $0x170] sm:$0xff]
          %v1200 = vld [vmem:[#allocation2 + $0x178] sm:$0xff]
          %v1201 = vld [vmem:[#allocation2 + $0x180] sm:$0xff]
          %v1202 = vld [vmem:[#allocation2 + $0x188] sm:$0xff]
          %v1203 = vld [vmem:[#allocation2 + $0x190] sm:$0xff]
          %v1204 = vld [vmem:[#allocation2 + $0x198] sm:$0xff]
          %v1205 = vld [vmem:[#allocation2 + $0x1a0] sm:$0xff]
          %v1206 = vld [vmem:[#allocation2 + $0x1a8] sm:$0xff]
          %v1207 = vld [vmem:[#allocation2 + $0x1b0] sm:$0xff]
          %v1208 = vld [vmem:[#allocation2 + $0x1b8] sm:$0xff]
          %v1209 = vld [vmem:[#allocation2 + $0x1c0] sm:$0xff]
          %v1210 = vld [vmem:[#allocation2 + $0x1c8] sm:$0xff]
          %v1211 = vld [vmem:[#allocation2 + $0x1d0] sm:$0xff]
          %v1212 = vld [vmem:[#allocation2 + $0x1d8] sm:$0xff]
          %v1213 = vld [vmem:[#allocation2 + $0x1e0] sm:$0xff]
          %v1214 = vld [vmem:[#allocation2 + $0x1e8] sm:$0xff]
          %v1215 = vld [vmem:[#allocation2 + $0x1f0] sm:$0xff]
          %v1216 = vld [vmem:[#allocation2 + $0x1f8] sm:$0xff]
          %v1217 = vpack.c.bf16 %v1154, %v1153
          %v1218 = vpack.c.bf16 %v1156, %v1155
          %v1219 = vpack.c.bf16 %v1158, %v1157
          %v1220 = vpack.c.bf16 %v1160, %v1159
          %v1221 = vpack.c.bf16 %v1162, %v1161
          %v1222 = vpack.c.bf16 %v1164, %v1163
          %v1223 = vpack.c.bf16 %v1166, %v1165
          %v1224 = vpack.c.bf16 %v1168, %v1167
          %v1225 = vpack.c.bf16 %v1170, %v1169
          %v1226 = vpack.c.bf16 %v1172, %v1171
          %v1227 = vpack.c.bf16 %v1174, %v1173
          %v1228 = vpack.c.bf16 %v1176, %v1175
          %v1229 = vpack.c.bf16 %v1178, %v1177
          %v1230 = vpack.c.bf16 %v1180, %v1179
          %v1231 = vpack.c.bf16 %v1182, %v1181
          %v1232 = vpack.c.bf16 %v1184, %v1183
          %v1233 = vpack.c.bf16 %v1186, %v1185
          %v1234 = vpack.c.bf16 %v1188, %v1187
          %v1235 = vpack.c.bf16 %v1190, %v1189
          %v1236 = vpack.c.bf16 %v1192, %v1191
          %v1237 = vpack.c.bf16 %v1194, %v1193
          %v1238 = vpack.c.bf16 %v1196, %v1195
          %v1239 = vpack.c.bf16 %v1198, %v1197
          %v1240 = vpack.c.bf16 %v1200, %v1199
          %v1241 = vpack.c.bf16 %v1202, %v1201
          %v1242 = vpack.c.bf16 %v1204, %v1203
          %v1243 = vpack.c.bf16 %v1206, %v1205
          %v1244 = vpack.c.bf16 %v1208, %v1207
          %v1245 = vpack.c.bf16 %v1210, %v1209
          %v1246 = vpack.c.bf16 %v1212, %v1211
          %v1247 = vpack.c.bf16 %v1214, %v1213
          %v1248 = vpack.c.bf16 %v1216, %v1215
          %v1281 = vunpack.c.l.b16 %v1217
          %v1282 = vunpack.c.h.b16 %v1217
          %v1283 = vunpack.c.l.b16 %v1218
          %v1284 = vunpack.c.h.b16 %v1218
          %v1285 = vunpack.c.l.b16 %v1219
          %v1286 = vunpack.c.h.b16 %v1219
          %v1287 = vunpack.c.l.b16 %v1220
          %v1288 = vunpack.c.h.b16 %v1220
          %v1289 = vunpack.c.l.b16 %v1221
          %v1290 = vunpack.c.h.b16 %v1221
          %v1291 = vunpack.c.l.b16 %v1222
          %v1292 = vunpack.c.h.b16 %v1222
          %v1293 = vunpack.c.l.b16 %v1223
          %v1294 = vunpack.c.h.b16 %v1223
          %v1295 = vunpack.c.l.b16 %v1224
          %v1296 = vunpack.c.h.b16 %v1224
          %v1297 = vunpack.c.l.b16 %v1225
          %v1298 = vunpack.c.h.b16 %v1225
          %v1299 = vunpack.c.l.b16 %v1226
          %v1300 = vunpack.c.h.b16 %v1226
          %v1301 = vunpack.c.l.b16 %v1227
          %v1302 = vunpack.c.h.b16 %v1227
          %v1303 = vunpack.c.l.b16 %v1228
          %v1304 = vunpack.c.h.b16 %v1228
          %v1305 = vunpack.c.l.b16 %v1229
          %v1306 = vunpack.c.h.b16 %v1229
          %v1307 = vunpack.c.l.b16 %v1230
          %v1308 = vunpack.c.h.b16 %v1230
          %v1309 = vunpack.c.l.b16 %v1231
          %v1310 = vunpack.c.h.b16 %v1231
          %v1311 = vunpack.c.l.b16 %v1232
          %v1312 = vunpack.c.h.b16 %v1232
          %v1313 = vunpack.c.l.b16 %v1233
          %v1314 = vunpack.c.h.b16 %v1233
          %v1315 = vunpack.c.l.b16 %v1234
          %v1316 = vunpack.c.h.b16 %v1234
          %v1317 = vunpack.c.l.b16 %v1235
          %v1318 = vunpack.c.h.b16 %v1235
          %v1319 = vunpack.c.l.b16 %v1236
          %v1320 = vunpack.c.h.b16 %v1236
          %v1321 = vunpack.c.l.b16 %v1237
          %v1322 = vunpack.c.h.b16 %v1237
          %v1323 = vunpack.c.l.b16 %v1238
          %v1324 = vunpack.c.h.b16 %v1238
          %v1325 = vunpack.c.l.b16 %v1239
          %v1326 = vunpack.c.h.b16 %v1239
          %v1327 = vunpack.c.l.b16 %v1240
          %v1328 = vunpack.c.h.b16 %v1240
          %v1329 = vunpack.c.l.b16 %v1241
          %v1330 = vunpack.c.h.b16 %v1241
          %v1331 = vunpack.c.l.b16 %v1242
          %v1332 = vunpack.c.h.b16 %v1242
          %v1333 = vunpack.c.l.b16 %v1243
          %v1334 = vunpack.c.h.b16 %v1243
          %v1335 = vunpack.c.l.b16 %v1244
          %v1336 = vunpack.c.h.b16 %v1244
          %v1337 = vunpack.c.l.b16 %v1245
          %v1338 = vunpack.c.h.b16 %v1245
          %v1339 = vunpack.c.l.b16 %v1246
          %v1340 = vunpack.c.h.b16 %v1246
          %v1341 = vunpack.c.l.b16 %v1247
          %v1342 = vunpack.c.h.b16 %v1247
          %v1343 = vunpack.c.l.b16 %v1248
          %v1344 = vunpack.c.h.b16 %v1248
          %v1345 = vpack.c.b16 %v1281, %v1281
          %v1346 = vpack.c.b16 %v1282, %v1282
          %v1347 = vpack.c.b16 %v1283, %v1283
          %v1348 = vpack.c.b16 %v1284, %v1284
          %v1349 = vpack.c.b16 %v1285, %v1285
          %v1350 = vpack.c.b16 %v1286, %v1286
          %v1351 = vpack.c.b16 %v1287, %v1287
          %v1352 = vpack.c.b16 %v1288, %v1288
          %v1353 = vpack.c.b16 %v1289, %v1289
          %v1354 = vpack.c.b16 %v1290, %v1290
          %v1355 = vpack.c.b16 %v1291, %v1291
          %v1356 = vpack.c.b16 %v1292, %v1292
          %v1357 = vpack.c.b16 %v1293, %v1293
          %v1358 = vpack.c.b16 %v1294, %v1294
          %v1359 = vpack.c.b16 %v1295, %v1295
          %v1360 = vpack.c.b16 %v1296, %v1296
          %v1361 = vpack.c.b16 %v1297, %v1297
          %v1362 = vpack.c.b16 %v1298, %v1298
          %v1363 = vpack.c.b16 %v1299, %v1299
          %v1364 = vpack.c.b16 %v1300, %v1300
          %v1365 = vpack.c.b16 %v1301, %v1301
          %v1366 = vpack.c.b16 %v1302, %v1302
          %v1367 = vpack.c.b16 %v1303, %v1303
          %v1368 = vpack.c.b16 %v1304, %v1304
          %v1369 = vpack.c.b16 %v1305, %v1305
          %v1370 = vpack.c.b16 %v1306, %v1306
          %v1371 = vpack.c.b16 %v1307, %v1307
          %v1372 = vpack.c.b16 %v1308, %v1308
          %v1373 = vpack.c.b16 %v1309, %v1309
          %v1374 = vpack.c.b16 %v1310, %v1310
          %v1375 = vpack.c.b16 %v1311, %v1311
          %v1376 = vpack.c.b16 %v1312, %v1312
          %v1377 = vpack.c.b16 %v1313, %v1313
          %v1378 = vpack.c.b16 %v1314, %v1314
          %v1379 = vpack.c.b16 %v1315, %v1315
          %v1380 = vpack.c.b16 %v1316, %v1316
          %v1381 = vpack.c.b16 %v1317, %v1317
          %v1382 = vpack.c.b16 %v1318, %v1318
          %v1383 = vpack.c.b16 %v1319, %v1319
          %v1384 = vpack.c.b16 %v1320, %v1320
          %v1385 = vpack.c.b16 %v1321, %v1321
          %v1386 = vpack.c.b16 %v1322, %v1322
          %v1387 = vpack.c.b16 %v1323, %v1323
          %v1388 = vpack.c.b16 %v1324, %v1324
          %v1389 = vpack.c.b16 %v1325, %v1325
          %v1390 = vpack.c.b16 %v1326, %v1326
          %v1391 = vpack.c.b16 %v1327, %v1327
          %v1392 = vpack.c.b16 %v1328, %v1328
          %v1393 = vpack.c.b16 %v1329, %v1329
          %v1394 = vpack.c.b16 %v1330, %v1330
          %v1395 = vpack.c.b16 %v1331, %v1331
          %v1396 = vpack.c.b16 %v1332, %v1332
          %v1397 = vpack.c.b16 %v1333, %v1333
          %v1398 = vpack.c.b16 %v1334, %v1334
          %v1399 = vpack.c.b16 %v1335, %v1335
          %v1400 = vpack.c.b16 %v1336, %v1336
          %v1401 = vpack.c.b16 %v1337, %v1337
          %v1402 = vpack.c.b16 %v1338, %v1338
          %v1403 = vpack.c.b16 %v1339, %v1339
          %v1404 = vpack.c.b16 %v1340, %v1340
          %v1405 = vpack.c.b16 %v1341, %v1341
          %v1406 = vpack.c.b16 %v1342, %v1342
          %v1407 = vpack.c.b16 %v1343, %v1343
          %v1408 = vpack.c.b16 %v1344, %v1344
          %1473 = vst [vmem:[%s233] sm:$0xf] %v1345
          %1474 = vst [vmem:[%s233 + $0x4] sm:$0xf] %v1346
          %1475 = vst [vmem:[%s233 + $0x8] sm:$0xf] %v1347
          %1476 = vst [vmem:[%s233 + $0xc] sm:$0xf] %v1348
          %1477 = vst [vmem:[%s233 + $0x10] sm:$0xf] %v1349
          %1478 = vst [vmem:[%s233 + $0x14] sm:$0xf] %v1350
          %1479 = vst [vmem:[%s233 + $0x18] sm:$0xf] %v1351
          %1480 = vst [vmem:[%s233 + $0x1c] sm:$0xf] %v1352
          %1481 = vst [vmem:[%s233 + $0x20] sm:$0xf] %v1353
          %1482 = vst [vmem:[%s233 + $0x24] sm:$0xf] %v1354
          %1483 = vst [vmem:[%s233 + $0x28] sm:$0xf] %v1355
          %1484 = vst [vmem:[%s233 + $0x2c] sm:$0xf] %v1356
          %1485 = vst [vmem:[%s233 + $0x30] sm:$0xf] %v1357
          %1486 = vst [vmem:[%s233 + $0x34] sm:$0xf] %v1358
          %1487 = vst [vmem:[%s233 + $0x38] sm:$0xf] %v1359
          %1488 = vst [vmem:[%s233 + $0x3c] sm:$0xf] %v1360
          %1489 = vst [vmem:[%s233 + $0x40] sm:$0xf] %v1361
          %1490 = vst [vmem:[%s233 + $0x44] sm:$0xf] %v1362
          %1491 = vst [vmem:[%s233 + $0x48] sm:$0xf] %v1363
          %1492 = vst [vmem:[%s233 + $0x4c] sm:$0xf] %v1364
          %1493 = vst [vmem:[%s233 + $0x50] sm:$0xf] %v1365
          %1494 = vst [vmem:[%s233 + $0x54] sm:$0xf] %v1366
          %1495 = vst [vmem:[%s233 + $0x58] sm:$0xf] %v1367
          %1496 = vst [vmem:[%s233 + $0x5c] sm:$0xf] %v1368
          %1497 = vst [vmem:[%s233 + $0x60] sm:$0xf] %v1369
          %1498 = vst [vmem:[%s233 + $0x64] sm:$0xf] %v1370
          %1499 = vst [vmem:[%s233 + $0x68] sm:$0xf] %v1371
          %1500 = vst [vmem:[%s233 + $0x6c] sm:$0xf] %v1372
          %1501 = vst [vmem:[%s233 + $0x70] sm:$0xf] %v1373
          %1502 = vst [vmem:[%s233 + $0x74] sm:$0xf] %v1374
          %1503 = vst [vmem:[%s233 + $0x78] sm:$0xf] %v1375
          %1504 = vst [vmem:[%s233 + $0x7c] sm:$0xf] %v1376
          %1505 = vst [vmem:[%s233 + $0x80] sm:$0xf] %v1377
          %1506 = vst [vmem:[%s233 + $0x84] sm:$0xf] %v1378
          %1507 = vst [vmem:[%s233 + $0x88] sm:$0xf] %v1379
          %1508 = vst [vmem:[%s233 + $0x8c] sm:$0xf] %v1380
          %1509 = vst [vmem:[%s233 + $0x90] sm:$0xf] %v1381
          %1510 = vst [vmem:[%s233 + $0x94] sm:$0xf] %v1382
          %1511 = vst [vmem:[%s233 + $0x98] sm:$0xf] %v1383
          %1512 = vst [vmem:[%s233 + $0x9c] sm:$0xf] %v1384
          %1513 = vst [vmem:[%s233 + $0xa0] sm:$0xf] %v1385
          %1514 = vst [vmem:[%s233 + $0xa4] sm:$0xf] %v1386
          %1515 = vst [vmem:[%s233 + $0xa8] sm:$0xf] %v1387
          %1516 = vst [vmem:[%s233 + $0xac] sm:$0xf] %v1388
          %1517 = vst [vmem:[%s233 + $0xb0] sm:$0xf] %v1389
          %1518 = vst [vmem:[%s233 + $0xb4] sm:$0xf] %v1390
          %1519 = vst [vmem:[%s233 + $0xb8] sm:$0xf] %v1391
          %1520 = vst [vmem:[%s233 + $0xbc] sm:$0xf] %v1392
          %1521 = vst [vmem:[%s233 + $0xc0] sm:$0xf] %v1393
          %1522 = vst [vmem:[%s233 + $0xc4] sm:$0xf] %v1394
          %1523 = vst [vmem:[%s233 + $0xc8] sm:$0xf] %v1395
          %1524 = vst [vmem:[%s233 + $0xcc] sm:$0xf] %v1396
          %1525 = vst [vmem:[%s233 + $0xd0] sm:$0xf] %v1397
          %1526 = vst [vmem:[%s233 + $0xd4] sm:$0xf] %v1398
          %1527 = vst [vmem:[%s233 + $0xd8] sm:$0xf] %v1399
          %1528 = vst [vmem:[%s233 + $0xdc] sm:$0xf] %v1400
          %1529 = vst [vmem:[%s233 + $0xe0] sm:$0xf] %v1401
          %1530 = vst [vmem:[%s233 + $0xe4] sm:$0xf] %v1402
          %1531 = vst [vmem:[%s233 + $0xe8] sm:$0xf] %v1403
          %1532 = vst [vmem:[%s233 + $0xec] sm:$0xf] %v1404
          %1533 = vst [vmem:[%s233 + $0xf0] sm:$0xf] %v1405
          %1534 = vst [vmem:[%s233 + $0xf4] sm:$0xf] %v1406
          %1535 = vst [vmem:[%s233 + $0xf8] sm:$0xf] %v1407
          %1536 = vst [vmem:[%s233 + $0xfc] sm:$0xf] %v1408
          %v1537 = vld [vmem:[%s240] sm:$0x1]
          %v1538 = vadd.f32 %v1153, %v1154
          %v1539 = vadd.f32 %v1538, %v1155
          %v1540 = vadd.f32 %v1539, %v1156
          %v1541 = vadd.f32 %v1540, %v1157
          %v1542 = vadd.f32 %v1541, %v1158
          %v1543 = vadd.f32 %v1542, %v1159
          %v1544 = vadd.f32 %v1543, %v1160
          %v1545 = vadd.f32 %v1544, %v1161
          %v1546 = vadd.f32 %v1545, %v1162
          %v1547 = vadd.f32 %v1546, %v1163
          %v1548 = vadd.f32 %v1547, %v1164
          %v1549 = vadd.f32 %v1548, %v1165
          %v1550 = vadd.f32 %v1549, %v1166
          %v1551 = vadd.f32 %v1550, %v1167
          %v1552 = vadd.f32 %v1551, %v1168
          %v1553 = vadd.f32 %v1552, %v1169
          %v1554 = vadd.f32 %v1553, %v1170
          %v1555 = vadd.f32 %v1554, %v1171
          %v1556 = vadd.f32 %v1555, %v1172
          %v1557 = vadd.f32 %v1556, %v1173
          %v1558 = vadd.f32 %v1557, %v1174
          %v1559 = vadd.f32 %v1558, %v1175
          %v1560 = vadd.f32 %v1559, %v1176
          %v1561 = vadd.f32 %v1560, %v1177
          %v1562 = vadd.f32 %v1561, %v1178
          %v1563 = vadd.f32 %v1562, %v1179
          %v1564 = vadd.f32 %v1563, %v1180
          %v1565 = vadd.f32 %v1564, %v1181
          %v1566 = vadd.f32 %v1565, %v1182
          %v1567 = vadd.f32 %v1566, %v1183
          %v1568 = vadd.f32 %v1567, %v1184
          %v1569 = vadd.f32 %v1568, %v1185
          %v1570 = vadd.f32 %v1569, %v1186
          %v1571 = vadd.f32 %v1570, %v1187
          %v1572 = vadd.f32 %v1571, %v1188
          %v1573 = vadd.f32 %v1572, %v1189
          %v1574 = vadd.f32 %v1573, %v1190
          %v1575 = vadd.f32 %v1574, %v1191
          %v1576 = vadd.f32 %v1575, %v1192
          %v1577 = vadd.f32 %v1576, %v1193
          %v1578 = vadd.f32 %v1577, %v1194
          %v1579 = vadd.f32 %v1578, %v1195
          %v1580 = vadd.f32 %v1579, %v1196
          %v1581 = vadd.f32 %v1580, %v1197
          %v1582 = vadd.f32 %v1581, %v1198
          %v1583 = vadd.f32 %v1582, %v1199
          %v1584 = vadd.f32 %v1583, %v1200
          %v1585 = vadd.f32 %v1584, %v1201
          %v1586 = vadd.f32 %v1585, %v1202
          %v1587 = vadd.f32 %v1586, %v1203
          %v1588 = vadd.f32 %v1587, %v1204
          %v1589 = vadd.f32 %v1588, %v1205
          %v1590 = vadd.f32 %v1589, %v1206
          %v1591 = vadd.f32 %v1590, %v1207
          %v1592 = vadd.f32 %v1591, %v1208
          %v1593 = vadd.f32 %v1592, %v1209
          %v1594 = vadd.f32 %v1593, %v1210
          %v1595 = vadd.f32 %v1594, %v1211
          %v1596 = vadd.f32 %v1595, %v1212
          %v1597 = vadd.f32 %v1596, %v1213
          %v1598 = vadd.f32 %v1597, %v1214
          %v1599 = vadd.f32 %v1598, %v1215
          %v1600 = vadd.f32 %v1599, %v1216
          %v1601 = vrot.slane %v1600, 4
          %v1602 = vadd.f32 %v1600, %v1601
          %v1603 = vrot.slane %v1602, 2
          %v1604 = vadd.f32 %v1602, %v1603
          %v1605 = vrot.slane %v1604, 1
          %v1606 = vadd.f32 %v1604, %v1605
          %v1607 = vadd.f32 %v1537, %v1606
          %1608 = vst [vmem:[%s240] sm:$0x1] %v1607
          %v1609 = vld [vmem:[%s240 + $0x1] sm:$0x1]
          %v1610 = vmul.f32 %v1153, %v1153
          %v1611 = vmul.f32 %v1154, %v1154
          %v1612 = vmul.f32 %v1155, %v1155
          %v1613 = vmul.f32 %v1156, %v1156
          %v1614 = vmul.f32 %v1157, %v1157
          %v1615 = vmul.f32 %v1158, %v1158
          %v1616 = vmul.f32 %v1159, %v1159
          %v1617 = vmul.f32 %v1160, %v1160
          %v1618 = vmul.f32 %v1161, %v1161
          %v1619 = vmul.f32 %v1162, %v1162
          %v1620 = vmul.f32 %v1163, %v1163
          %v1621 = vmul.f32 %v1164, %v1164
          %v1622 = vmul.f32 %v1165, %v1165
          %v1623 = vmul.f32 %v1166, %v1166
          %v1624 = vmul.f32 %v1167, %v1167
          %v1625 = vmul.f32 %v1168, %v1168
          %v1626 = vmul.f32 %v1169, %v1169
          %v1627 = vmul.f32 %v1170, %v1170
          %v1628 = vmul.f32 %v1171, %v1171
          %v1629 = vmul.f32 %v1172, %v1172
          %v1630 = vmul.f32 %v1173, %v1173
          %v1631 = vmul.f32 %v1174, %v1174
          %v1632 = vmul.f32 %v1175, %v1175
          %v1633 = vmul.f32 %v1176, %v1176
          %v1634 = vmul.f32 %v1177, %v1177
          %v1635 = vmul.f32 %v1178, %v1178
          %v1636 = vmul.f32 %v1179, %v1179
          %v1637 = vmul.f32 %v1180, %v1180
          %v1638 = vmul.f32 %v1181, %v1181
          %v1639 = vmul.f32 %v1182, %v1182
          %v1640 = vmul.f32 %v1183, %v1183
          %v1641 = vmul.f32 %v1184, %v1184
          %v1642 = vmul.f32 %v1185, %v1185
          %v1643 = vmul.f32 %v1186, %v1186
          %v1644 = vmul.f32 %v1187, %v1187
          %v1645 = vmul.f32 %v1188, %v1188
          %v1646 = vmul.f32 %v1189, %v1189
          %v1647 = vmul.f32 %v1190, %v1190
          %v1648 = vmul.f32 %v1191, %v1191
          %v1649 = vmul.f32 %v1192, %v1192
          %v1650 = vmul.f32 %v1193, %v1193
          %v1651 = vmul.f32 %v1194, %v1194
          %v1652 = vmul.f32 %v1195, %v1195
          %v1653 = vmul.f32 %v1196, %v1196
          %v1654 = vmul.f32 %v1197, %v1197
          %v1655 = vmul.f32 %v1198, %v1198
          %v1656 = vmul.f32 %v1199, %v1199
          %v1657 = vmul.f32 %v1200, %v1200
          %v1658 = vmul.f32 %v1201, %v1201
          %v1659 = vmul.f32 %v1202, %v1202
          %v1660 = vmul.f32 %v1203, %v1203
          %v1661 = vmul.f32 %v1204, %v1204
          %v1662 = vmul.f32 %v1205, %v1205
          %v1663 = vmul.f32 %v1206, %v1206
          %v1664 = vmul.f32 %v1207, %v1207
          %v1665 = vmul.f32 %v1208, %v1208
          %v1666 = vmul.f32 %v1209, %v1209
          %v1667 = vmul.f32 %v1210, %v1210
          %v1668 = vmul.f32 %v1211, %v1211
          %v1669 = vmul.f32 %v1212, %v1212
          %v1670 = vmul.f32 %v1213, %v1213
          %v1671 = vmul.f32 %v1214, %v1214
          %v1672 = vmul.f32 %v1215, %v1215
          %v1673 = vmul.f32 %v1216, %v1216
          %v1674 = vadd.f32 %v1610, %v1611
          %v1675 = vadd.f32 %v1674, %v1612
          %v1676 = vadd.f32 %v1675, %v1613
          %v1677 = vadd.f32 %v1676, %v1614
          %v1678 = vadd.f32 %v1677, %v1615
          %v1679 = vadd.f32 %v1678, %v1616
          %v1680 = vadd.f32 %v1679, %v1617
          %v1681 = vadd.f32 %v1680, %v1618
          %v1682 = vadd.f32 %v1681, %v1619
          %v1683 = vadd.f32 %v1682, %v1620
          %v1684 = vadd.f32 %v1683, %v1621
          %v1685 = vadd.f32 %v1684, %v1622
          %v1686 = vadd.f32 %v1685, %v1623
          %v1687 = vadd.f32 %v1686, %v1624
          %v1688 = vadd.f32 %v1687, %v1625
          %v1689 = vadd.f32 %v1688, %v1626
          %v1690 = vadd.f32 %v1689, %v1627
          %v1691 = vadd.f32 %v1690, %v1628
          %v1692 = vadd.f32 %v1691, %v1629
          %v1693 = vadd.f32 %v1692, %v1630
          %v1694 = vadd.f32 %v1693, %v1631
          %v1695 = vadd.f32 %v1694, %v1632
          %v1696 = vadd.f32 %v1695, %v1633
          %v1697 = vadd.f32 %v1696, %v1634
          %v1698 = vadd.f32 %v1697, %v1635
          %v1699 = vadd.f32 %v1698, %v1636
          %v1700 = vadd.f32 %v1699, %v1637
          %v1701 = vadd.f32 %v1700, %v1638
          %v1702 = vadd.f32 %v1701, %v1639
          %v1703 = vadd.f32 %v1702, %v1640
          %v1704 = vadd.f32 %v1703, %v1641
          %v1705 = vadd.f32 %v1704, %v1642
          %v1706 = vadd.f32 %v1705, %v1643
          %v1707 = vadd.f32 %v1706, %v1644
          %v1708 = vadd.f32 %v1707, %v1645
          %v1709 = vadd.f32 %v1708, %v1646
          %v1710 = vadd.f32 %v1709, %v1647
          %v1711 = vadd.f32 %v1710, %v1648
          %v1712 = vadd.f32 %v1711, %v1649
          %v1713 = vadd.f32 %v1712, %v1650
          %v1714 = vadd.f32 %v1713, %v1651
          %v1715 = vadd.f32 %v1714, %v1652
          %v1716 = vadd.f32 %v1715, %v1653
          %v1717 = vadd.f32 %v1716, %v1654
          %v1718 = vadd.f32 %v1717, %v1655
          %v1719 = vadd.f32 %v1718, %v1656
          %v1720 = vadd.f32 %v1719, %v1657
          %v1721 = vadd.f32 %v1720, %v1658
          %v1722 = vadd.f32 %v1721, %v1659
          %v1723 = vadd.f32 %v1722, %v1660
          %v1724 = vadd.f32 %v1723, %v1661
          %v1725 = vadd.f32 %v1724, %v1662
          %v1726 = vadd.f32 %v1725, %v1663
          %v1727 = vadd.f32 %v1726, %v1664
          %v1728 = vadd.f32 %v1727, %v1665
          %v1729 = vadd.f32 %v1728, %v1666
          %v1730 = vadd.f32 %v1729, %v1667
          %v1731 = vadd.f32 %v1730, %v1668
          %v1732 = vadd.f32 %v1731, %v1669
          %v1733 = vadd.f32 %v1732, %v1670
          %v1734 = vadd.f32 %v1733, %v1671
          %v1735 = vadd.f32 %v1734, %v1672
          %v1736 = vadd.f32 %v1735, %v1673
          %v1737 = vrot.slane %v1736, 4
          %v1738 = vadd.f32 %v1736, %v1737
          %v1739 = vrot.slane %v1738, 2
          %v1740 = vadd.f32 %v1738, %v1739
          %v1741 = vrot.slane %v1740, 1
          %v1742 = vadd.f32 %v1740, %v1741
          %v1743 = vadd.f32 %v1609, %v1742
          %1744 = vst [vmem:[%s240 + $0x1] sm:$0x1] %v1743
        $region40: #{tpu_custom_call.1} parent=27 // pred_fallthru
          _
        %s1745 = sand.u32 %s108, 1
        %s1746 = scalar_lea.sflag [#allocation4], %s1745
        %s1747 = sand.u32 %s108, 1
        %s1748 = smul.addr %s1747, 256
        %s1749 = scalar_lea.vmem [#allocation3], %s1748
        %s1750 = sand.u32 %s134, 1
        %s1751 = scalar_lea.sflag [#allocation6], %s1750
        %s1752 = sand.u32 %s134, 1
        %s1753 = smul.addr %s1752, 8
        %s1754 = scalar_lea.vmem [#allocation5], %s1753
        // Predicated region
        $region41: #{tpu_custom_call.1} parent=27 // pred_check
          %p1755 = pneg %p118
        $region42: #{tpu_custom_call.1} parent=27 // pred_check_branch
          %1757 = sbr.rel (%p1755) target = $region44
        $region43: #{tpu_custom_call.1} parent=27 // pred_region
          %s1758 = smul.u32 64, %s27
          %s1760 = ssub.s32 4096, 4096
          %1761 = vsyncadd %s1746, %s1760
          %s1762 = smul.addr %s26, 64
          %s1763 = sadd.s32 %s1758, %s1762
          %s1764 = smul.addr %s1763, 64
          %s1765 = scalar_lea.hbm %s2, %s1764
          %s1766 = sshll.u32 %s1749, 4
          %s1767 = int_to_ptr.vmem [resolvable:$true] %s1766
          %1772 = dma.vmem_to_hbm [thread:$0]  %s1767, 4096, %s1765, %s1746, 64, 64, 4
        $region44: #{tpu_custom_call.1} parent=27 // pred_fallthru
          _
        // Predicated region
        $region45: #{tpu_custom_call.1} parent=27 // pred_check
          %p1773 = pneg %p144
        $region46: #{tpu_custom_call.1} parent=27 // pred_check_branch
          %1775 = sbr.rel (%p1773) target = $region48
        $region47: #{tpu_custom_call.1} parent=27 // pred_region
          %s1777 = ssub.s32 128, 128
          %1778 = vsyncadd %s1751, %s1777
          %s1779 = smul.addr %s26, 128
          %s1780 = scalar_lea.hbm %s3, %s1779
          %s1782 = sshll.u32 %s1754, 4
          %s1783 = int_to_ptr.vmem [resolvable:$true] %s1782
          %1785 = dma.vmem_to_hbm [thread:$0]  %s1783, 128, %s1780, %s1751
        $region48: #{tpu_custom_call.1} parent=27 // pred_fallthru
          _
      $region28: #{tpu_custom_call.1} parent=5 // pred_fallthru
        _
      %p1786 = scmp.le.s32.totalorder 2, %s16
      // Predicated region
      $region49: #{tpu_custom_call.1} parent=5 // pred_check
        %p1787 = pneg %p1786
      $region50: #{tpu_custom_call.1} parent=5 // pred_check_branch
        %1789 = sbr.rel (%p1787) target = $region52
      $region51: #{tpu_custom_call.1} parent=5 // pred_region
        %s1790 = ssub.s32 %s16, 2
        // Predicated region
        $region53: #{tpu_custom_call.1} parent=51 // pred_check
          %p1791 = pneg %p124
        $region54: #{tpu_custom_call.1} parent=51 // pred_check_branch
          %1793 = sbr.rel (%p1791) target = $region56
        $region55: #{tpu_custom_call.1} parent=51 // pred_region
          %s1794 = sand.u32 %s109, 1
          %s1795 = scalar_lea.sflag [#allocation4], %s1794
          %s1796 = sand.u32 %s109, 1
          %s1797 = smul.addr %s1796, 256
          %s1798 = scalar_lea.vmem [#allocation3], %s1797
          %1799 = dma.done %s1795, 4096
        $region56: #{tpu_custom_call.1} parent=51 // pred_fallthru
          _
        // Predicated region
        $region57: #{tpu_custom_call.1} parent=51 // pred_check
          %p1800 = pneg %p150
        $region58: #{tpu_custom_call.1} parent=51 // pred_check_branch
          %1802 = sbr.rel (%p1800) target = $region60
        $region59: #{tpu_custom_call.1} parent=51 // pred_region
          %s1803 = sand.u32 %s135, 1
          %s1804 = scalar_lea.sflag [#allocation6], %s1803
          %s1805 = sand.u32 %s135, 1
          %s1806 = smul.addr %s1805, 8
          %s1807 = scalar_lea.vmem [#allocation5], %s1806
          %1808 = dma.done %s1804, 128
        $region60: #{tpu_custom_call.1} parent=51 // pred_fallthru
          _
      $region52: #{tpu_custom_call.1} parent=5 // pred_fallthru
        _
    $region6: #{tpu_custom_call.1} parent=1 // loop_footer
      %s20 = sadd.s32 1, %s16
    $region7: #{tpu_custom_call.1} parent=1 // loop_footer_branch
      %15 = sbr.rel target = $region3
    $region8: #{tpu_custom_call.1} parent=1 // loop_exit
      _
    %1809 = vsyncpa [#allocation4], 1
    %s1810 = scalar_lea.sflag [#allocation4], 1
    %1811 = vsyncpa %s1810, 1
    %1812 = vsyncpa [#allocation6], 1
    %s1813 = scalar_lea.sflag [#allocation6], 1
    %1814 = vsyncpa %s1813, 1

</llo_original>
